<compile_context>
chip_gen: v5e
topology: v5e:2x2
jax: 0.10.0
libtpu: 0.0.40
codegen_flags: <defaults>
</compile_context>

<pallas_src>
import random

import jax
import jax.numpy as jnp
from jax.experimental import pallas as pl
from jax.experimental.pallas import tpu as pltpu


def _round_up(x, m):
    return (x + m - 1) // m * m


# ----------------------------------------------------------------------------
# Encoder: one pallas_call; hoisted input matmul + in-kernel GRU recurrence.
# ----------------------------------------------------------------------------
def encoder_kernel(x_ref, wih_ref, whh_ref, bih_ref, bhh_ref, hid_ref, gi_ref):
    S, B, E = x_ref.shape
    H = whh_ref.shape[0]

    # Hoisted, h-independent input-side projection for ALL timesteps at once:
    # one (S*B, E) x (E, 3H) MXU matmul instead of S tiny ones.
    x_all = x_ref[...].reshape(S * B, E)
    gi_all = (jnp.dot(x_all, wih_ref[...], preferred_element_type=jnp.float32)
              + bih_ref[...])
    gi_ref[...] = gi_all.reshape(S, B, 3 * H)

    def step(t, h):
        gi = gi_ref[t]                                              # (B, 3H)
        gh = (jnp.dot(h, whh_ref[...], preferred_element_type=jnp.float32)
              + bhh_ref[...])
        r = jax.nn.sigmoid(gi[:, 0:H] + gh[:, 0:H])
        z = jax.nn.sigmoid(gi[:, H:2 * H] + gh[:, H:2 * H])
        n = jnp.tanh(gi[:, 2 * H:3 * H] + r * gh[:, 2 * H:3 * H])
        h_new = (1.0 - z) * n + z * h
        hid_ref[t] = h_new
        return h_new

    jax.lax.fori_loop(0, S, step, jnp.zeros((B, H), jnp.float32), unroll=True)


def run_encoder(x_tm, W_ih, W_hh, b_ih, b_hh):
    S, B, E = x_tm.shape
    H = W_hh.shape[0]

    def _full(shape):
        nd = len(shape)
        return pl.BlockSpec(shape, lambda i, _nd=nd: (0,) * _nd)

    return pl.pallas_call(
        encoder_kernel,
        out_shape=jax.ShapeDtypeStruct((S, B, H), jnp.float32),
        grid=(1,),
        in_specs=[_full((S, B, E)), _full((E, 3 * H)), _full((H, 3 * H)),
                  _full((1, 3 * H)), _full((1, 3 * H))],
        out_specs=_full((S, B, H)),
        scratch_shapes=[pltpu.VMEM((S, B, 3 * H), jnp.float32)],
        compiler_params=pltpu.CompilerParams(dimension_semantics=("arbitrary",)),
    )(x_tm, W_ih, W_hh, b_ih, b_hh)


# ----------------------------------------------------------------------------
# Decoder: the whole autoregressive loop fused into one pallas_call.
#   grid = (T-1,) ; h and previous prediction carried in VMEM scratch;
#   teacher-forcing mask arrives via scalar prefetch (SMEM).
# ----------------------------------------------------------------------------
def decoder_kernel(sel_ref, tgt_ref, enc_ref, h0_ref, emb_ref,
                   wih_ref, whh_ref, bih_ref, bhh_ref, wout_ref, bout_ref,
                   logits_ref, h_scr, pred_scr):
    i = pl.program_id(0)
    Bp, H = h_scr.shape
    Vp = bout_ref.shape[1]

    @pl.when(i == 0)
    def _():
        h_scr[...] = h0_ref[...]
        pred_scr[...] = jnp.zeros_like(pred_scr)

    # ---- select this step's input token: prev prediction vs. ground truth ----
    use_pred = sel_ref[i]                                           # scalar (0 at step 0)
    tok = jnp.where(use_pred == 1, pred_scr[...], tgt_ref[i])       # (Bp, 1) int32

    # ---- embedding lookup as a one-hot matmul on the MXU ----
    onehot = (tok == jax.lax.broadcasted_iota(jnp.int32, (Bp, Vp), 1))
    emb = jnp.dot(onehot.astype(jnp.float32), emb_ref[...],
                  preferred_element_type=jnp.float32)               # (Bp, E)

    h = h_scr[...]                                                  # (Bp, H)
    enc = enc_ref[...]                                              # (Bp, S, H)

    # ---- Luong dot attention, batched on the MXU ----
    s = jnp.einsum('bqh,bsh->bqs', h[:, None, :], enc,
                   preferred_element_type=jnp.float32)              # (Bp, 1, S)
    s = s - jnp.max(s, axis=-1, keepdims=True)
    e = jnp.exp(s)
    attn = e * pl.reciprocal(jnp.sum(e, axis=-1, keepdims=True), approx=True)
    ctx = jnp.einsum('bqs,bsh->bqh', attn, enc,
                     preferred_element_type=jnp.float32)[:, 0, :]   # (Bp, H)

    # ---- GRU cell on [embedding ; context]  (single fused matmul) ----
    xin = jnp.concatenate([emb, ctx], axis=1)                       # (Bp, E+H)
    gi = jnp.dot(xin, wih_ref[...], preferred_element_type=jnp.float32) + bih_ref[...]
    gh = jnp.dot(h, whh_ref[...], preferred_element_type=jnp.float32) + bhh_ref[...]
    r = jax.nn.sigmoid(gi[:, 0:H] + gh[:, 0:H])
    z = jax.nn.sigmoid(gi[:, H:2 * H] + gh[:, H:2 * H])
    n = jnp.tanh(gi[:, 2 * H:3 * H] + r * gh[:, 2 * H:3 * H])
    h_new = (1.0 - z) * n + z * h

    # ---- output projection on [h_new ; context]  (single fused matmul) ----
    ho = jnp.concatenate([h_new, ctx], axis=1)                      # (Bp, 2H)
    logits = (jnp.dot(ho, wout_ref[...], preferred_element_type=jnp.float32)
              + bout_ref[...])                                      # (Bp, Vp)

    # ---- in-kernel argmax (first max, like torch.argmax) for feedback ----
    col = jax.lax.broadcasted_iota(jnp.int32, (Bp, Vp), 1)
    is_max = logits == jnp.max(logits, axis=1, keepdims=True)
    pred = jnp.min(jnp.where(is_max, col, Vp), axis=1, keepdims=True)

    h_scr[...] = h_new
    pred_scr[...] = pred.astype(jnp.int32)
    logits_ref[0] = logits


def run_decoder(sel, tgt_tm, enc_bsh, h0, emb_pad,
                W_ih, W_hh, b_ih, b_hh, W_out, b_out):
    T, Bp, _ = tgt_tm.shape
    S, H = enc_bsh.shape[1], enc_bsh.shape[2]
    EH = W_ih.shape[0]
    Vp = W_out.shape[1]

    # TODO(synk): at real model sizes (H~1k, V~32k, long S) tile V and S here
    # instead of keeping W_out / enc fully resident (v7x has only 64 MiB VMEM).
    grid_spec = pltpu.PrefetchScalarGridSpec(
        num_scalar_prefetch=1,
        grid=(T - 1,),
        in_specs=[
            pl.BlockSpec((T, Bp, 1), lambda i, sel_ref: (0, 0, 0)),   # targets (resident)
            pl.BlockSpec((Bp, S, H), lambda i, sel_ref: (0, 0, 0)),   # encoder hiddens
            pl.BlockSpec((Bp, H), lambda i, sel_ref: (0, 0)),         # initial hidden
            pl.BlockSpec(emb_pad.shape, lambda i, sel_ref: (0, 0)),   # dec embedding
            pl.BlockSpec((EH, 3 * H), lambda i, sel_ref: (0, 0)),     # W_ih [emb;ctx]
            pl.BlockSpec((H, 3 * H), lambda i, sel_ref: (0, 0)),      # W_hh
            pl.BlockSpec((1, 3 * H), lambda i, sel_ref: (0, 0)),      # b_ih
            pl.BlockSpec((1, 3 * H), lambda i, sel_ref: (0, 0)),      # b_hh
            pl.BlockSpec((2 * H, Vp), lambda i, sel_ref: (0, 0)),     # W_out [h;ctx]
            pl.BlockSpec((1, Vp), lambda i, sel_ref: (0, 0)),         # b_out
        ],
        out_specs=pl.BlockSpec((1, Bp, Vp), lambda i, sel_ref: (i, 0, 0)),
        scratch_shapes=[pltpu.VMEM((Bp, H), jnp.float32),   # carried hidden
                        pltpu.VMEM((Bp, 1), jnp.int32)],    # carried prediction
    )
    return pl.pallas_call(
        decoder_kernel,
        out_shape=jax.ShapeDtypeStruct((T - 1, Bp, Vp), jnp.float32),
        grid_spec=grid_spec,
        compiler_params=pltpu.CompilerParams(dimension_semantics=("arbitrary",)),
    )(sel, tgt_tm, enc_bsh, h0, emb_pad, W_ih, W_hh, b_ih, b_hh, W_out, b_out)


# ----------------------------------------------------------------------------
# Jitted device pipeline: embedding -> encoder kernel -> fused decoder kernel.
# ----------------------------------------------------------------------------
@jax.jit
def _seq2seq_core(params, inputs, targets, sel):
    B, T = targets.shape
    V = params["dec_W_out_h"].shape[1]
    Bp = _round_up(B, 8)       # >= 8 sublanes
    Vp = _round_up(V, 128)     # lane-dense logits

    # -------- encoder --------
    x = jnp.take(params["enc_emb"], inputs, axis=0)                  # (B, S, E)
    x = jnp.pad(x, ((0, Bp - B), (0, 0), (0, 0)))                    # (Bp, S, E)
    x_tm = jnp.transpose(x, (1, 0, 2))                               # (S, Bp, E)
    hid = run_encoder(x_tm, params["enc_W_ih"], params["enc_W_hh"],
                      params["enc_b_ih"], params["enc_b_hh"])        # (S, Bp, H)
    enc_bsh = jnp.transpose(hid, (1, 0, 2))                          # (Bp, S, H)
    h0 = hid[-1]                                                     # (Bp, H)

    # -------- decoder operand prep (fused / padded weights) --------
    emb_pad = jnp.pad(params["dec_emb"], ((0, Vp - V), (0, 0)))      # (Vp, E)
    W_ih = jnp.concatenate([params["dec_W_ih_e"], params["dec_W_ih_c"]], axis=0)
    W_out = jnp.pad(
        jnp.concatenate([params["dec_W_out_h"], params["dec_W_out_c"]], axis=0),
        ((0, 0), (0, Vp - V)))                                       # (2H, Vp)
    b_out = jnp.pad(params["dec_b_out"], ((0, 0), (0, Vp - V)),
                    constant_values=-1e30)                           # pad cols never win argmax
    tgt_tm = jnp.transpose(jnp.pad(targets, ((0, Bp - B), (0, 0))), (1, 0))[:, :, None]

    return run_decoder(sel, tgt_tm, enc_bsh, h0, emb_pad,
                       W_ih, params["dec_W_hh"], params["dec_b_ih"],
                       params["dec_b_hh"], W_out, b_out)             # (T-1, Bp, Vp)


def seq2seq_forward(params, inputs, targets, teacher_forcing_ratio=0.5):
    B, T = targets.shape
    V = params["dec_W_out_h"].shape[1]

    # Teacher-forcing decisions are drawn on the host and fed to the fused
    # kernel as an int32 mask (sel[i]==1 -> feed previous prediction).
    # TODO(synk): the reference calls the undefined torch.random(); a seeded
    # host RNG stands in for it, keeping the `rand > ratio` selection rule.
    random.seed(0)
    draws = [random.random() for _ in range(1, T)]
    sel = jnp.asarray(
        [0] + [int(draws[i - 1] > teacher_forcing_ratio) for i in range(1, T - 1)],
        jnp.int32)                                                   # (T-1,)

    logits_steps = _seq2seq_core(params, inputs, targets, sel)       # (T-1, Bp, Vp)
    logits = jnp.transpose(logits_steps, (1, 0, 2))[:B, :, :V]       # (B, T-1, V)
    return jnp.concatenate(
        [jnp.zeros((B, 1, V), jnp.float32), logits], axis=1)         # (B, T, V)


# ----------------------------------------------------------------------------
# Deterministic parameter construction.
# ----------------------------------------------------------------------------
def init_params(key, *, src_vocab, tgt_vocab, emb, hidden):
    ks = jax.random.split(key, 13)
    s = 0.1
    return {
        # encoder: embedding + GRU (weights stored pre-transposed: in_dim x 3H)
        "enc_emb":  s * jax.random.normal(ks[0], (src_vocab, emb), jnp.float32),
        "enc_W_ih": s * jax.random.normal(ks[1], (emb, 3 * hidden), jnp.float32),
        "enc_W_hh": s * jax.random.normal(ks[2], (hidden, 3 * hidden), jnp.float32),
        "enc_b_ih": s * jax.random.normal(ks[3], (1, 3 * hidden), jnp.float32),
        "enc_b_hh": s * jax.random.normal(ks[4], (1, 3 * hidden), jnp.float32),
        # decoder: embedding + attention GRU cell + output projection
        "dec_emb":     s * jax.random.normal(ks[5], (tgt_vocab, emb), jnp.float32),
        "dec_W_ih_e":  s * jax.random.normal(ks[6], (emb, 3 * hidden), jnp.float32),
        "dec_W_ih_c":  s * jax.random.normal(ks[7], (hidden, 3 * hidden), jnp.float32),
        "dec_W_hh":    s * jax.random.normal(ks[8], (hidden, 3 * hidden), jnp.float32),
        "dec_b_ih":    s * jax.random.normal(ks[9], (1, 3 * hidden), jnp.float32),
        "dec_b_hh":    s * jax.random.normal(ks[10], (1, 3 * hidden), jnp.float32),
        "dec_W_out_h": s * jax.random.normal(ks[11], (hidden, tgt_vocab), jnp.float32),
        "dec_W_out_c": s * jax.random.normal(ks[12], (hidden, tgt_vocab), jnp.float32),
        "dec_b_out":   jnp.zeros((1, tgt_vocab), jnp.float32),
    }


if __name__ == "__main__":
    B, S_IN, T_TGT = 2, 8, 6
    EMB, HID = 32, 32
    SRC_V, TGT_V = 50, 40

    key = jax.random.PRNGKey(0)
    k_in, k_tgt, k_par = jax.random.split(key, 3)
    inputs = jax.random.randint(k_in, (B, S_IN), 0, SRC_V, dtype=jnp.int32)
    targets = jax.random.randint(k_tgt, (B, T_TGT), 0, TGT_V, dtype=jnp.int32)
    params = init_params(k_par, src_vocab=SRC_V, tgt_vocab=TGT_V, emb=EMB, hidden=HID)

    out = seq2seq_forward(params, inputs, targets, teacher_forcing_ratio=0.5)
    out = jax.block_until_ready(out)
    assert out.shape == (B, T_TGT, TGT_V)
    assert bool(jnp.all(jnp.isfinite(out)))
    print("KERNEL_OK")
</pallas_src>

<mosaic_0001>
module attributes {stable_mosaic.version = 11 : i64} {
  func.func @encoder_kernel(%arg0: i32, %arg1: memref<8x8x32xf32, #tpu.memory_space<vmem>>, %arg2: memref<32x96xf32, #tpu.memory_space<vmem>>, %arg3: memref<32x96xf32, #tpu.memory_space<vmem>>, %arg4: memref<1x96xf32, #tpu.memory_space<vmem>>, %arg5: memref<1x96xf32, #tpu.memory_space<vmem>>, %arg6: memref<8x8x32xf32, #tpu.memory_space<vmem>>, %arg7: memref<8x8x96xf32, #tpu.memory_space<vmem>>) attributes {dimension_semantics = [#tpu.dimension_semantics<arbitrary>], iteration_bounds = array<i64: 1>, scalar_prefetch = 0 : i64, scratch_operands = 1 : i64, tpu.core_type = #tpu.core_type<tc>, window_params = [{pipeline_mode = #tpu.pipeline_mode<synchronous>, transform_indices = @transform_0, window_bounds = array<i64: 8, 8, 32>}, {pipeline_mode = #tpu.pipeline_mode<synchronous>, transform_indices = @transform_1, window_bounds = array<i64: 32, 96>}, {pipeline_mode = #tpu.pipeline_mode<synchronous>, transform_indices = @transform_2, window_bounds = array<i64: 32, 96>}, {pipeline_mode = #tpu.pipeline_mode<synchronous>, transform_indices = @transform_3, window_bounds = array<i64: 1, 96>}, {pipeline_mode = #tpu.pipeline_mode<synchronous>, transform_indices = @transform_4, window_bounds = array<i64: 1, 96>}, {pipeline_mode = #tpu.pipeline_mode<synchronous>, transform_indices = @transform_5, window_bounds = array<i64: 8, 8, 32>}]} {
    %c0 = arith.constant 0 : index
    %c0_0 = arith.constant 0 : index
    %c0_1 = arith.constant 0 : index
    %0 = vector.load %arg1[%c0, %c0_0, %c0_1] : memref<8x8x32xf32, #tpu.memory_space<vmem>>, vector<8x8x32xf32>
    %1 = vector.shape_cast %0 : vector<8x8x32xf32> to vector<64x32xf32>
    %c0_2 = arith.constant 0 : index
    %c0_3 = arith.constant 0 : index
    %2 = vector.load %arg2[%c0_2, %c0_3] : memref<32x96xf32, #tpu.memory_space<vmem>>, vector<32x96xf32>
    %cst = arith.constant dense<0.000000e+00> : vector<64x96xf32>
    %3 = tpu.matmul %1, %2, %cst {dimension_numbers = #tpu.dot_dimension_numbers<[1], [0], [0], [1], [0, 0, 1, 1], [], []>} : vector<64x32xf32>, vector<32x96xf32>, vector<64x96xf32> -> vector<64x96xf32>
    %c0_4 = arith.constant 0 : index
    %c0_5 = arith.constant 0 : index
    %4 = vector.load %arg4[%c0_4, %c0_5] : memref<1x96xf32, #tpu.memory_space<vmem>>, vector<1x96xf32>
    %5 = vector.broadcast %4 : vector<1x96xf32> to vector<64x96xf32>
    %6 = arith.addf %3, %5 : vector<64x96xf32>
    %7 = vector.shape_cast %6 : vector<64x96xf32> to vector<8x8x96xf32>
    %c0_6 = arith.constant 0 : index
    %c0_7 = arith.constant 0 : index
    %c0_8 = arith.constant 0 : index
    %8 = vector.load %arg7[%c0_6, %c0_7, %c0_8] : memref<8x8x96xf32, #tpu.memory_space<vmem>>, vector<8x8x96xf32>
    tpu.vector_store %arg7[%c0_6, %c0_7, %c0_8], %7 {strides = array<i32>} : memref<8x8x96xf32, #tpu.memory_space<vmem>>, vector<8x8x96xf32>,
    %cst_9 = arith.constant 0.000000e+00 : f32
    %9 = vector.broadcast %cst_9 : f32 to vector<8x32xf32>
    %c0_i32 = arith.constant 0 : i32
    %10 = arith.index_cast %c0_i32 : i32 to index
    %c0_10 = arith.constant 0 : index
    %c0_11 = arith.constant 0 : index
    %11 = vector.load %arg7[%10, %c0_10, %c0_11] : memref<8x8x96xf32, #tpu.memory_space<vmem>>, vector<1x8x96xf32>
    %12 = vector.shape_cast %11 : vector<1x8x96xf32> to vector<8x96xf32>
    %c0_12 = arith.constant 0 : index
    %c0_13 = arith.constant 0 : index
    %13 = vector.load %arg3[%c0_12, %c0_13] : memref<32x96xf32, #tpu.memory_space<vmem>>, vector<32x96xf32>
    %cst_14 = arith.constant dense<0.000000e+00> : vector<8x96xf32>
    %14 = tpu.matmul %9, %13, %cst_14 {dimension_numbers = #tpu.dot_dimension_numbers<[1], [0], [0], [1], [0, 0, 1, 1], [], []>} : vector<8x32xf32>, vector<32x96xf32>, vector<8x96xf32> -> vector<8x96xf32>
    %c0_15 = arith.constant 0 : index
    %c0_16 = arith.constant 0 : index
    %15 = vector.load %arg5[%c0_15, %c0_16] : memref<1x96xf32, #tpu.memory_space<vmem>>, vector<1x96xf32>
    %16 = vector.broadcast %15 : vector<1x96xf32> to vector<8x96xf32>
    %17 = arith.addf %14, %16 : vector<8x96xf32>
    %18 = vector.extract_strided_slice %12 {offsets = [0, 0], sizes = [8, 32], strides = [1, 1]} : vector<8x96xf32> to vector<8x32xf32>
    %19 = vector.extract_strided_slice %17 {offsets = [0, 0], sizes = [8, 32], strides = [1, 1]} : vector<8x96xf32> to vector<8x32xf32>
    %20 = arith.addf %18, %19 : vector<8x32xf32>
    %21 = arith.negf %20 : vector<8x32xf32>
    %22 = math.exp %21 : vector<8x32xf32>
    %cst_17 = arith.constant 1.000000e+00 : f32
    %23 = vector.broadcast %cst_17 : f32 to vector<8x32xf32>
    %24 = arith.addf %23, %22 : vector<8x32xf32>
    %25 = arith.divf %23, %24 : vector<8x32xf32>
    %26 = vector.extract_strided_slice %12 {offsets = [0, 32], sizes = [8, 32], strides = [1, 1]} : vector<8x96xf32> to vector<8x32xf32>
    %27 = vector.extract_strided_slice %17 {offsets = [0, 32], sizes = [8, 32], strides = [1, 1]} : vector<8x96xf32> to vector<8x32xf32>
    %28 = arith.addf %26, %27 : vector<8x32xf32>
    %29 = arith.negf %28 : vector<8x32xf32>
    %30 = math.exp %29 : vector<8x32xf32>
    %cst_18 = arith.constant 1.000000e+00 : f32
    %31 = vector.broadcast %cst_18 : f32 to vector<8x32xf32>
    %32 = arith.addf %31, %30 : vector<8x32xf32>
    %33 = arith.divf %31, %32 : vector<8x32xf32>
    %34 = vector.extract_strided_slice %12 {offsets = [0, 64], sizes = [8, 32], strides = [1, 1]} : vector<8x96xf32> to vector<8x32xf32>
    %35 = vector.extract_strided_slice %17 {offsets = [0, 64], sizes = [8, 32], strides = [1, 1]} : vector<8x96xf32> to vector<8x32xf32>
    %36 = arith.mulf %25, %35 : vector<8x32xf32>
    %37 = arith.addf %34, %36 : vector<8x32xf32>
    %38 = math.tanh %37 : vector<8x32xf32>
    %cst_19 = arith.constant 1.000000e+00 : f32
    %39 = vector.broadcast %cst_19 : f32 to vector<8x32xf32>
    %40 = arith.subf %39, %33 : vector<8x32xf32>
    %41 = arith.mulf %40, %38 : vector<8x32xf32>
    %42 = arith.mulf %33, %9 : vector<8x32xf32>
    %43 = arith.addf %41, %42 : vector<8x32xf32>
    %44 = arith.index_cast %c0_i32 : i32 to index
    %c0_20 = arith.constant 0 : index
    %c0_21 = arith.constant 0 : index
    %45 = vector.load %arg6[%44, %c0_20, %c0_21] : memref<8x8x32xf32, #tpu.memory_space<vmem>>, vector<1x8x32xf32>
    %46 = vector.shape_cast %45 : vector<1x8x32xf32> to vector<8x32xf32>
    %47 = vector.shape_cast %43 : vector<8x32xf32> to vector<1x8x32xf32>
    tpu.vector_store %arg6[%44, %c0_20, %c0_21], %47 {strides = array<i32>} : memref<8x8x32xf32, #tpu.memory_space<vmem>>, vector<1x8x32xf32>,
    %c1_i32 = arith.constant 1 : i32
    %48 = arith.index_cast %c1_i32 : i32 to index
    %c0_22 = arith.constant 0 : index
    %c0_23 = arith.constant 0 : index
    %49 = vector.load %arg7[%48, %c0_22, %c0_23] : memref<8x8x96xf32, #tpu.memory_space<vmem>>, vector<1x8x96xf32>
    %50 = vector.shape_cast %49 : vector<1x8x96xf32> to vector<8x96xf32>
    %c0_24 = arith.constant 0 : index
    %c0_25 = arith.constant 0 : index
    %51 = vector.load %arg3[%c0_24, %c0_25] : memref<32x96xf32, #tpu.memory_space<vmem>>, vector<32x96xf32>
    %cst_26 = arith.constant dense<0.000000e+00> : vector<8x96xf32>
    %52 = tpu.matmul %43, %51, %cst_26 {dimension_numbers = #tpu.dot_dimension_numbers<[1], [0], [0], [1], [0, 0, 1, 1], [], []>} : vector<8x32xf32>, vector<32x96xf32>, vector<8x96xf32> -> vector<8x96xf32>
    %c0_27 = arith.constant 0 : index
    %c0_28 = arith.constant 0 : index
    %53 = vector.load %arg5[%c0_27, %c0_28] : memref<1x96xf32, #tpu.memory_space<vmem>>, vector<1x96xf32>
    %54 = vector.broadcast %53 : vector<1x96xf32> to vector<8x96xf32>
    %55 = arith.addf %52, %54 : vector<8x96xf32>
    %56 = vector.extract_strided_slice %50 {offsets = [0, 0], sizes = [8, 32], strides = [1, 1]} : vector<8x96xf32> to vector<8x32xf32>
    %57 = vector.extract_strided_slice %55 {offsets = [0, 0], sizes = [8, 32], strides = [1, 1]} : vector<8x96xf32> to vector<8x32xf32>
    %58 = arith.addf %56, %57 : vector<8x32xf32>
    %59 = arith.negf %58 : vector<8x32xf32>
    %60 = math.exp %59 : vector<8x32xf32>
    %cst_29 = arith.constant 1.000000e+00 : f32
    %61 = vector.broadcast %cst_29 : f32 to vector<8x32xf32>
    %62 = arith.addf %61, %60 : vector<8x32xf32>
    %63 = arith.divf %61, %62 : vector<8x32xf32>
    %64 = vector.extract_strided_slice %50 {offsets = [0, 32], sizes = [8, 32], strides = [1, 1]} : vector<8x96xf32> to vector<8x32xf32>
    %65 = vector.extract_strided_slice %55 {offsets = [0, 32], sizes = [8, 32], strides = [1, 1]} : vector<8x96xf32> to vector<8x32xf32>
    %66 = arith.addf %64, %65 : vector<8x32xf32>
    %67 = arith.negf %66 : vector<8x32xf32>
    %68 = math.exp %67 : vector<8x32xf32>
    %cst_30 = arith.constant 1.000000e+00 : f32
    %69 = vector.broadcast %cst_30 : f32 to vector<8x32xf32>
    %70 = arith.addf %69, %68 : vector<8x32xf32>
    %71 = arith.divf %69, %70 : vector<8x32xf32>
    %72 = vector.extract_strided_slice %50 {offsets = [0, 64], sizes = [8, 32], strides = [1, 1]} : vector<8x96xf32> to vector<8x32xf32>
    %73 = vector.extract_strided_slice %55 {offsets = [0, 64], sizes = [8, 32], strides = [1, 1]} : vector<8x96xf32> to vector<8x32xf32>
    %74 = arith.mulf %63, %73 : vector<8x32xf32>
    %75 = arith.addf %72, %74 : vector<8x32xf32>
    %76 = math.tanh %75 : vector<8x32xf32>
    %cst_31 = arith.constant 1.000000e+00 : f32
    %77 = vector.broadcast %cst_31 : f32 to vector<8x32xf32>
    %78 = arith.subf %77, %71 : vector<8x32xf32>
    %79 = arith.mulf %78, %76 : vector<8x32xf32>
    %80 = arith.mulf %71, %43 : vector<8x32xf32>
    %81 = arith.addf %79, %80 : vector<8x32xf32>
    %82 = arith.index_cast %c1_i32 : i32 to index
    %c0_32 = arith.constant 0 : index
    %c0_33 = arith.constant 0 : index
    %83 = vector.load %arg6[%82, %c0_32, %c0_33] : memref<8x8x32xf32, #tpu.memory_space<vmem>>, vector<1x8x32xf32>
    %84 = vector.shape_cast %83 : vector<1x8x32xf32> to vector<8x32xf32>
    %85 = vector.shape_cast %81 : vector<8x32xf32> to vector<1x8x32xf32>
    tpu.vector_store %arg6[%82, %c0_32, %c0_33], %85 {strides = array<i32>} : memref<8x8x32xf32, #tpu.memory_space<vmem>>, vector<1x8x32xf32>,
    %c2_i32 = arith.constant 2 : i32
    %86 = arith.index_cast %c2_i32 : i32 to index
    %c0_34 = arith.constant 0 : index
    %c0_35 = arith.constant 0 : index
    %87 = vector.load %arg7[%86, %c0_34, %c0_35] : memref<8x8x96xf32, #tpu.memory_space<vmem>>, vector<1x8x96xf32>
    %88 = vector.shape_cast %87 : vector<1x8x96xf32> to vector<8x96xf32>
    %c0_36 = arith.constant 0 : index
    %c0_37 = arith.constant 0 : index
    %89 = vector.load %arg3[%c0_36, %c0_37] : memref<32x96xf32, #tpu.memory_space<vmem>>, vector<32x96xf32>
    %cst_38 = arith.constant dense<0.000000e+00> : vector<8x96xf32>
    %90 = tpu.matmul %81, %89, %cst_38 {dimension_numbers = #tpu.dot_dimension_numbers<[1], [0], [0], [1], [0, 0, 1, 1], [], []>} : vector<8x32xf32>, vector<32x96xf32>, vector<8x96xf32> -> vector<8x96xf32>
    %c0_39 = arith.constant 0 : index
    %c0_40 = arith.constant 0 : index
    %91 = vector.load %arg5[%c0_39, %c0_40] : memref<1x96xf32, #tpu.memory_space<vmem>>, vector<1x96xf32>
    %92 = vector.broadcast %91 : vector<1x96xf32> to vector<8x96xf32>
    %93 = arith.addf %90, %92 : vector<8x96xf32>
    %94 = vector.extract_strided_slice %88 {offsets = [0, 0], sizes = [8, 32], strides = [1, 1]} : vector<8x96xf32> to vector<8x32xf32>
    %95 = vector.extract_strided_slice %93 {offsets = [0, 0], sizes = [8, 32], strides = [1, 1]} : vector<8x96xf32> to vector<8x32xf32>
    %96 = arith.addf %94, %95 : vector<8x32xf32>
    %97 = arith.negf %96 : vector<8x32xf32>
    %98 = math.exp %97 : vector<8x32xf32>
    %cst_41 = arith.constant 1.000000e+00 : f32
    %99 = vector.broadcast %cst_41 : f32 to vector<8x32xf32>
    %100 = arith.addf %99, %98 : vector<8x32xf32>
    %101 = arith.divf %99, %100 : vector<8x32xf32>
    %102 = vector.extract_strided_slice %88 {offsets = [0, 32], sizes = [8, 32], strides = [1, 1]} : vector<8x96xf32> to vector<8x32xf32>
    %103 = vector.extract_strided_slice %93 {offsets = [0, 32], sizes = [8, 32], strides = [1, 1]} : vector<8x96xf32> to vector<8x32xf32>
    %104 = arith.addf %102, %103 : vector<8x32xf32>
    %105 = arith.negf %104 : vector<8x32xf32>
    %106 = math.exp %105 : vector<8x32xf32>
    %cst_42 = arith.constant 1.000000e+00 : f32
    %107 = vector.broadcast %cst_42 : f32 to vector<8x32xf32>
    %108 = arith.addf %107, %106 : vector<8x32xf32>
    %109 = arith.divf %107, %108 : vector<8x32xf32>
    %110 = vector.extract_strided_slice %88 {offsets = [0, 64], sizes = [8, 32], strides = [1, 1]} : vector<8x96xf32> to vector<8x32xf32>
    %111 = vector.extract_strided_slice %93 {offsets = [0, 64], sizes = [8, 32], strides = [1, 1]} : vector<8x96xf32> to vector<8x32xf32>
    %112 = arith.mulf %101, %111 : vector<8x32xf32>
    %113 = arith.addf %110, %112 : vector<8x32xf32>
    %114 = math.tanh %113 : vector<8x32xf32>
    %cst_43 = arith.constant 1.000000e+00 : f32
    %115 = vector.broadcast %cst_43 : f32 to vector<8x32xf32>
    %116 = arith.subf %115, %109 : vector<8x32xf32>
    %117 = arith.mulf %116, %114 : vector<8x32xf32>
    %118 = arith.mulf %109, %81 : vector<8x32xf32>
    %119 = arith.addf %117, %118 : vector<8x32xf32>
    %120 = arith.index_cast %c2_i32 : i32 to index
    %c0_44 = arith.constant 0 : index
    %c0_45 = arith.constant 0 : index
    %121 = vector.load %arg6[%120, %c0_44, %c0_45] : memref<8x8x32xf32, #tpu.memory_space<vmem>>, vector<1x8x32xf32>
    %122 = vector.shape_cast %121 : vector<1x8x32xf32> to vector<8x32xf32>
    %123 = vector.shape_cast %119 : vector<8x32xf32> to vector<1x8x32xf32>
    tpu.vector_store %arg6[%120, %c0_44, %c0_45], %123 {strides = array<i32>} : memref<8x8x32xf32, #tpu.memory_space<vmem>>, vector<1x8x32xf32>,
    %c3_i32 = arith.constant 3 : i32
    %124 = arith.index_cast %c3_i32 : i32 to index
    %c0_46 = arith.constant 0 : index
    %c0_47 = arith.constant 0 : index
    %125 = vector.load %arg7[%124, %c0_46, %c0_47] : memref<8x8x96xf32, #tpu.memory_space<vmem>>, vector<1x8x96xf32>
    %126 = vector.shape_cast %125 : vector<1x8x96xf32> to vector<8x96xf32>
    %c0_48 = arith.constant 0 : index
    %c0_49 = arith.constant 0 : index
    %127 = vector.load %arg3[%c0_48, %c0_49] : memref<32x96xf32, #tpu.memory_space<vmem>>, vector<32x96xf32>
    %cst_50 = arith.constant dense<0.000000e+00> : vector<8x96xf32>
    %128 = tpu.matmul %119, %127, %cst_50 {dimension_numbers = #tpu.dot_dimension_numbers<[1], [0], [0], [1], [0, 0, 1, 1], [], []>} : vector<8x32xf32>, vector<32x96xf32>, vector<8x96xf32> -> vector<8x96xf32>
    %c0_51 = arith.constant 0 : index
    %c0_52 = arith.constant 0 : index
    %129 = vector.load %arg5[%c0_51, %c0_52] : memref<1x96xf32, #tpu.memory_space<vmem>>, vector<1x96xf32>
    %130 = vector.broadcast %129 : vector<1x96xf32> to vector<8x96xf32>
    %131 = arith.addf %128, %130 : vector<8x96xf32>
    %132 = vector.extract_strided_slice %126 {offsets = [0, 0], sizes = [8, 32], strides = [1, 1]} : vector<8x96xf32> to vector<8x32xf32>
    %133 = vector.extract_strided_slice %131 {offsets = [0, 0], sizes = [8, 32], strides = [1, 1]} : vector<8x96xf32> to vector<8x32xf32>
    %134 = arith.addf %132, %133 : vector<8x32xf32>
    %135 = arith.negf %134 : vector<8x32xf32>
    %136 = math.exp %135 : vector<8x32xf32>
    %cst_53 = arith.constant 1.000000e+00 : f32
    %137 = vector.broadcast %cst_53 : f32 to vector<8x32xf32>
    %138 = arith.addf %137, %136 : vector<8x32xf32>
    %139 = arith.divf %137, %138 : vector<8x32xf32>
    %140 = vector.extract_strided_slice %126 {offsets = [0, 32], sizes = [8, 32], strides = [1, 1]} : vector<8x96xf32> to vector<8x32xf32>
    %141 = vector.extract_strided_slice %131 {offsets = [0, 32], sizes = [8, 32], strides = [1, 1]} : vector<8x96xf32> to vector<8x32xf32>
    %142 = arith.addf %140, %141 : vector<8x32xf32>
    %143 = arith.negf %142 : vector<8x32xf32>
    %144 = math.exp %143 : vector<8x32xf32>
    %cst_54 = arith.constant 1.000000e+00 : f32
    %145 = vector.broadcast %cst_54 : f32 to vector<8x32xf32>
    %146 = arith.addf %145, %144 : vector<8x32xf32>
    %147 = arith.divf %145, %146 : vector<8x32xf32>
    %148 = vector.extract_strided_slice %126 {offsets = [0, 64], sizes = [8, 32], strides = [1, 1]} : vector<8x96xf32> to vector<8x32xf32>
    %149 = vector.extract_strided_slice %131 {offsets = [0, 64], sizes = [8, 32], strides = [1, 1]} : vector<8x96xf32> to vector<8x32xf32>
    %150 = arith.mulf %139, %149 : vector<8x32xf32>
    %151 = arith.addf %148, %150 : vector<8x32xf32>
    %152 = math.tanh %151 : vector<8x32xf32>
    %cst_55 = arith.constant 1.000000e+00 : f32
    %153 = vector.broadcast %cst_55 : f32 to vector<8x32xf32>
    %154 = arith.subf %153, %147 : vector<8x32xf32>
    %155 = arith.mulf %154, %152 : vector<8x32xf32>
    %156 = arith.mulf %147, %119 : vector<8x32xf32>
    %157 = arith.addf %155, %156 : vector<8x32xf32>
    %158 = arith.index_cast %c3_i32 : i32 to index
    %c0_56 = arith.constant 0 : index
    %c0_57 = arith.constant 0 : index
    %159 = vector.load %arg6[%158, %c0_56, %c0_57] : memref<8x8x32xf32, #tpu.memory_space<vmem>>, vector<1x8x32xf32>
    %160 = vector.shape_cast %159 : vector<1x8x32xf32> to vector<8x32xf32>
    %161 = vector.shape_cast %157 : vector<8x32xf32> to vector<1x8x32xf32>
    tpu.vector_store %arg6[%158, %c0_56, %c0_57], %161 {strides = array<i32>} : memref<8x8x32xf32, #tpu.memory_space<vmem>>, vector<1x8x32xf32>,
    %c4_i32 = arith.constant 4 : i32
    %162 = arith.index_cast %c4_i32 : i32 to index
    %c0_58 = arith.constant 0 : index
    %c0_59 = arith.constant 0 : index
    %163 = vector.load %arg7[%162, %c0_58, %c0_59] : memref<8x8x96xf32, #tpu.memory_space<vmem>>, vector<1x8x96xf32>
    %164 = vector.shape_cast %163 : vector<1x8x96xf32> to vector<8x96xf32>
    %c0_60 = arith.constant 0 : index
    %c0_61 = arith.constant 0 : index
    %165 = vector.load %arg3[%c0_60, %c0_61] : memref<32x96xf32, #tpu.memory_space<vmem>>, vector<32x96xf32>
    %cst_62 = arith.constant dense<0.000000e+00> : vector<8x96xf32>
    %166 = tpu.matmul %157, %165, %cst_62 {dimension_numbers = #tpu.dot_dimension_numbers<[1], [0], [0], [1], [0, 0, 1, 1], [], []>} : vector<8x32xf32>, vector<32x96xf32>, vector<8x96xf32> -> vector<8x96xf32>
    %c0_63 = arith.constant 0 : index
    %c0_64 = arith.constant 0 : index
    %167 = vector.load %arg5[%c0_63, %c0_64] : memref<1x96xf32, #tpu.memory_space<vmem>>, vector<1x96xf32>
    %168 = vector.broadcast %167 : vector<1x96xf32> to vector<8x96xf32>
    %169 = arith.addf %166, %168 : vector<8x96xf32>
    %170 = vector.extract_strided_slice %164 {offsets = [0, 0], sizes = [8, 32], strides = [1, 1]} : vector<8x96xf32> to vector<8x32xf32>
    %171 = vector.extract_strided_slice %169 {offsets = [0, 0], sizes = [8, 32], strides = [1, 1]} : vector<8x96xf32> to vector<8x32xf32>
    %172 = arith.addf %170, %171 : vector<8x32xf32>
    %173 = arith.negf %172 : vector<8x32xf32>
    %174 = math.exp %173 : vector<8x32xf32>
    %cst_65 = arith.constant 1.000000e+00 : f32
    %175 = vector.broadcast %cst_65 : f32 to vector<8x32xf32>
    %176 = arith.addf %175, %174 : vector<8x32xf32>
    %177 = arith.divf %175, %176 : vector<8x32xf32>
    %178 = vector.extract_strided_slice %164 {offsets = [0, 32], sizes = [8, 32], strides = [1, 1]} : vector<8x96xf32> to vector<8x32xf32>
    %179 = vector.extract_strided_slice %169 {offsets = [0, 32], sizes = [8, 32], strides = [1, 1]} : vector<8x96xf32> to vector<8x32xf32>
    %180 = arith.addf %178, %179 : vector<8x32xf32>
    %181 = arith.negf %180 : vector<8x32xf32>
    %182 = math.exp %181 : vector<8x32xf32>
    %cst_66 = arith.constant 1.000000e+00 : f32
    %183 = vector.broadcast %cst_66 : f32 to vector<8x32xf32>
    %184 = arith.addf %183, %182 : vector<8x32xf32>
    %185 = arith.divf %183, %184 : vector<8x32xf32>
    %186 = vector.extract_strided_slice %164 {offsets = [0, 64], sizes = [8, 32], strides = [1, 1]} : vector<8x96xf32> to vector<8x32xf32>
    %187 = vector.extract_strided_slice %169 {offsets = [0, 64], sizes = [8, 32], strides = [1, 1]} : vector<8x96xf32> to vector<8x32xf32>
    %188 = arith.mulf %177, %187 : vector<8x32xf32>
    %189 = arith.addf %186, %188 : vector<8x32xf32>
    %190 = math.tanh %189 : vector<8x32xf32>
    %cst_67 = arith.constant 1.000000e+00 : f32
    %191 = vector.broadcast %cst_67 : f32 to vector<8x32xf32>
    %192 = arith.subf %191, %185 : vector<8x32xf32>
    %193 = arith.mulf %192, %190 : vector<8x32xf32>
    %194 = arith.mulf %185, %157 : vector<8x32xf32>
    %195 = arith.addf %193, %194 : vector<8x32xf32>
    %196 = arith.index_cast %c4_i32 : i32 to index
    %c0_68 = arith.constant 0 : index
    %c0_69 = arith.constant 0 : index
    %197 = vector.load %arg6[%196, %c0_68, %c0_69] : memref<8x8x32xf32, #tpu.memory_space<vmem>>, vector<1x8x32xf32>
    %198 = vector.shape_cast %197 : vector<1x8x32xf32> to vector<8x32xf32>
    %199 = vector.shape_cast %195 : vector<8x32xf32> to vector<1x8x32xf32>
    tpu.vector_store %arg6[%196, %c0_68, %c0_69], %199 {strides = array<i32>} : memref<8x8x32xf32, #tpu.memory_space<vmem>>, vector<1x8x32xf32>,
    %c5_i32 = arith.constant 5 : i32
    %200 = arith.index_cast %c5_i32 : i32 to index
    %c0_70 = arith.constant 0 : index
    %c0_71 = arith.constant 0 : index
    %201 = vector.load %arg7[%200, %c0_70, %c0_71] : memref<8x8x96xf32, #tpu.memory_space<vmem>>, vector<1x8x96xf32>
    %202 = vector.shape_cast %201 : vector<1x8x96xf32> to vector<8x96xf32>
    %c0_72 = arith.constant 0 : index
    %c0_73 = arith.constant 0 : index
    %203 = vector.load %arg3[%c0_72, %c0_73] : memref<32x96xf32, #tpu.memory_space<vmem>>, vector<32x96xf32>
    %cst_74 = arith.constant dense<0.000000e+00> : vector<8x96xf32>
    %204 = tpu.matmul %195, %203, %cst_74 {dimension_numbers = #tpu.dot_dimension_numbers<[1], [0], [0], [1], [0, 0, 1, 1], [], []>} : vector<8x32xf32>, vector<32x96xf32>, vector<8x96xf32> -> vector<8x96xf32>
    %c0_75 = arith.constant 0 : index
    %c0_76 = arith.constant 0 : index
    %205 = vector.load %arg5[%c0_75, %c0_76] : memref<1x96xf32, #tpu.memory_space<vmem>>, vector<1x96xf32>
    %206 = vector.broadcast %205 : vector<1x96xf32> to vector<8x96xf32>
    %207 = arith.addf %204, %206 : vector<8x96xf32>
    %208 = vector.extract_strided_slice %202 {offsets = [0, 0], sizes = [8, 32], strides = [1, 1]} : vector<8x96xf32> to vector<8x32xf32>
    %209 = vector.extract_strided_slice %207 {offsets = [0, 0], sizes = [8, 32], strides = [1, 1]} : vector<8x96xf32> to vector<8x32xf32>
    %210 = arith.addf %208, %209 : vector<8x32xf32>
    %211 = arith.negf %210 : vector<8x32xf32>
    %212 = math.exp %211 : vector<8x32xf32>
    %cst_77 = arith.constant 1.000000e+00 : f32
    %213 = vector.broadcast %cst_77 : f32 to vector<8x32xf32>
    %214 = arith.addf %213, %212 : vector<8x32xf32>
    %215 = arith.divf %213, %214 : vector<8x32xf32>
    %216 = vector.extract_strided_slice %202 {offsets = [0, 32], sizes = [8, 32], strides = [1, 1]} : vector<8x96xf32> to vector<8x32xf32>
    %217 = vector.extract_strided_slice %207 {offsets = [0, 32], sizes = [8, 32], strides = [1, 1]} : vector<8x96xf32> to vector<8x32xf32>
    %218 = arith.addf %216, %217 : vector<8x32xf32>
    %219 = arith.negf %218 : vector<8x32xf32>
    %220 = math.exp %219 : vector<8x32xf32>
    %cst_78 = arith.constant 1.000000e+00 : f32
    %221 = vector.broadcast %cst_78 : f32 to vector<8x32xf32>
    %222 = arith.addf %221, %220 : vector<8x32xf32>
    %223 = arith.divf %221, %222 : vector<8x32xf32>
    %224 = vector.extract_strided_slice %202 {offsets = [0, 64], sizes = [8, 32], strides = [1, 1]} : vector<8x96xf32> to vector<8x32xf32>
    %225 = vector.extract_strided_slice %207 {offsets = [0, 64], sizes = [8, 32], strides = [1, 1]} : vector<8x96xf32> to vector<8x32xf32>
    %226 = arith.mulf %215, %225 : vector<8x32xf32>
    %227 = arith.addf %224, %226 : vector<8x32xf32>
    %228 = math.tanh %227 : vector<8x32xf32>
    %cst_79 = arith.constant 1.000000e+00 : f32
    %229 = vector.broadcast %cst_79 : f32 to vector<8x32xf32>
    %230 = arith.subf %229, %223 : vector<8x32xf32>
    %231 = arith.mulf %230, %228 : vector<8x32xf32>
    %232 = arith.mulf %223, %195 : vector<8x32xf32>
    %233 = arith.addf %231, %232 : vector<8x32xf32>
    %234 = arith.index_cast %c5_i32 : i32 to index
    %c0_80 = arith.constant 0 : index
    %c0_81 = arith.constant 0 : index
    %235 = vector.load %arg6[%234, %c0_80, %c0_81] : memref<8x8x32xf32, #tpu.memory_space<vmem>>, vector<1x8x32xf32>
    %236 = vector.shape_cast %235 : vector<1x8x32xf32> to vector<8x32xf32>
    %237 = vector.shape_cast %233 : vector<8x32xf32> to vector<1x8x32xf32>
    tpu.vector_store %arg6[%234, %c0_80, %c0_81], %237 {strides = array<i32>} : memref<8x8x32xf32, #tpu.memory_space<vmem>>, vector<1x8x32xf32>,
    %c6_i32 = arith.constant 6 : i32
    %238 = arith.index_cast %c6_i32 : i32 to index
    %c0_82 = arith.constant 0 : index
    %c0_83 = arith.constant 0 : index
    %239 = vector.load %arg7[%238, %c0_82, %c0_83] : memref<8x8x96xf32, #tpu.memory_space<vmem>>, vector<1x8x96xf32>
    %240 = vector.shape_cast %239 : vector<1x8x96xf32> to vector<8x96xf32>
    %c0_84 = arith.constant 0 : index
    %c0_85 = arith.constant 0 : index
    %241 = vector.load %arg3[%c0_84, %c0_85] : memref<32x96xf32, #tpu.memory_space<vmem>>, vector<32x96xf32>
    %cst_86 = arith.constant dense<0.000000e+00> : vector<8x96xf32>
    %242 = tpu.matmul %233, %241, %cst_86 {dimension_numbers = #tpu.dot_dimension_numbers<[1], [0], [0], [1], [0, 0, 1, 1], [], []>} : vector<8x32xf32>, vector<32x96xf32>, vector<8x96xf32> -> vector<8x96xf32>
    %c0_87 = arith.constant 0 : index
    %c0_88 = arith.constant 0 : index
    %243 = vector.load %arg5[%c0_87, %c0_88] : memref<1x96xf32, #tpu.memory_space<vmem>>, vector<1x96xf32>
    %244 = vector.broadcast %243 : vector<1x96xf32> to vector<8x96xf32>
    %245 = arith.addf %242, %244 : vector<8x96xf32>
    %246 = vector.extract_strided_slice %240 {offsets = [0, 0], sizes = [8, 32], strides = [1, 1]} : vector<8x96xf32> to vector<8x32xf32>
    %247 = vector.extract_strided_slice %245 {offsets = [0, 0], sizes = [8, 32], strides = [1, 1]} : vector<8x96xf32> to vector<8x32xf32>
    %248 = arith.addf %246, %247 : vector<8x32xf32>
    %249 = arith.negf %248 : vector<8x32xf32>
    %250 = math.exp %249 : vector<8x32xf32>
    %cst_89 = arith.constant 1.000000e+00 : f32
    %251 = vector.broadcast %cst_89 : f32 to vector<8x32xf32>
    %252 = arith.addf %251, %250 : vector<8x32xf32>
    %253 = arith.divf %251, %252 : vector<8x32xf32>
    %254 = vector.extract_strided_slice %240 {offsets = [0, 32], sizes = [8, 32], strides = [1, 1]} : vector<8x96xf32> to vector<8x32xf32>
    %255 = vector.extract_strided_slice %245 {offsets = [0, 32], sizes = [8, 32], strides = [1, 1]} : vector<8x96xf32> to vector<8x32xf32>
    %256 = arith.addf %254, %255 : vector<8x32xf32>
    %257 = arith.negf %256 : vector<8x32xf32>
    %258 = math.exp %257 : vector<8x32xf32>
    %cst_90 = arith.constant 1.000000e+00 : f32
    %259 = vector.broadcast %cst_90 : f32 to vector<8x32xf32>
    %260 = arith.addf %259, %258 : vector<8x32xf32>
    %261 = arith.divf %259, %260 : vector<8x32xf32>
    %262 = vector.extract_strided_slice %240 {offsets = [0, 64], sizes = [8, 32], strides = [1, 1]} : vector<8x96xf32> to vector<8x32xf32>
    %263 = vector.extract_strided_slice %245 {offsets = [0, 64], sizes = [8, 32], strides = [1, 1]} : vector<8x96xf32> to vector<8x32xf32>
    %264 = arith.mulf %253, %263 : vector<8x32xf32>
    %265 = arith.addf %262, %264 : vector<8x32xf32>
    %266 = math.tanh %265 : vector<8x32xf32>
    %cst_91 = arith.constant 1.000000e+00 : f32
    %267 = vector.broadcast %cst_91 : f32 to vector<8x32xf32>
    %268 = arith.subf %267, %261 : vector<8x32xf32>
    %269 = arith.mulf %268, %266 : vector<8x32xf32>
    %270 = arith.mulf %261, %233 : vector<8x32xf32>
    %271 = arith.addf %269, %270 : vector<8x32xf32>
    %272 = arith.index_cast %c6_i32 : i32 to index
    %c0_92 = arith.constant 0 : index
    %c0_93 = arith.constant 0 : index
    %273 = vector.load %arg6[%272, %c0_92, %c0_93] : memref<8x8x32xf32, #tpu.memory_space<vmem>>, vector<1x8x32xf32>
    %274 = vector.shape_cast %273 : vector<1x8x32xf32> to vector<8x32xf32>
    %275 = vector.shape_cast %271 : vector<8x32xf32> to vector<1x8x32xf32>
    tpu.vector_store %arg6[%272, %c0_92, %c0_93], %275 {strides = array<i32>} : memref<8x8x32xf32, #tpu.memory_space<vmem>>, vector<1x8x32xf32>,
    %c7_i32 = arith.constant 7 : i32
    %276 = arith.index_cast %c7_i32 : i32 to index
    %c0_94 = arith.constant 0 : index
    %c0_95 = arith.constant 0 : index
    %277 = vector.load %arg7[%276, %c0_94, %c0_95] : memref<8x8x96xf32, #tpu.memory_space<vmem>>, vector<1x8x96xf32>
    %278 = vector.shape_cast %277 : vector<1x8x96xf32> to vector<8x96xf32>
    %c0_96 = arith.constant 0 : index
    %c0_97 = arith.constant 0 : index
    %279 = vector.load %arg3[%c0_96, %c0_97] : memref<32x96xf32, #tpu.memory_space<vmem>>, vector<32x96xf32>
    %cst_98 = arith.constant dense<0.000000e+00> : vector<8x96xf32>
    %280 = tpu.matmul %271, %279, %cst_98 {dimension_numbers = #tpu.dot_dimension_numbers<[1], [0], [0], [1], [0, 0, 1, 1], [], []>} : vector<8x32xf32>, vector<32x96xf32>, vector<8x96xf32> -> vector<8x96xf32>
    %c0_99 = arith.constant 0 : index
    %c0_100 = arith.constant 0 : index
    %281 = vector.load %arg5[%c0_99, %c0_100] : memref<1x96xf32, #tpu.memory_space<vmem>>, vector<1x96xf32>
    %282 = vector.broadcast %281 : vector<1x96xf32> to vector<8x96xf32>
    %283 = arith.addf %280, %282 : vector<8x96xf32>
    %284 = vector.extract_strided_slice %278 {offsets = [0, 0], sizes = [8, 32], strides = [1, 1]} : vector<8x96xf32> to vector<8x32xf32>
    %285 = vector.extract_strided_slice %283 {offsets = [0, 0], sizes = [8, 32], strides = [1, 1]} : vector<8x96xf32> to vector<8x32xf32>
    %286 = arith.addf %284, %285 : vector<8x32xf32>
    %287 = arith.negf %286 : vector<8x32xf32>
    %288 = math.exp %287 : vector<8x32xf32>
    %cst_101 = arith.constant 1.000000e+00 : f32
    %289 = vector.broadcast %cst_101 : f32 to vector<8x32xf32>
    %290 = arith.addf %289, %288 : vector<8x32xf32>
    %291 = arith.divf %289, %290 : vector<8x32xf32>
    %292 = vector.extract_strided_slice %278 {offsets = [0, 32], sizes = [8, 32], strides = [1, 1]} : vector<8x96xf32> to vector<8x32xf32>
    %293 = vector.extract_strided_slice %283 {offsets = [0, 32], sizes = [8, 32], strides = [1, 1]} : vector<8x96xf32> to vector<8x32xf32>
    %294 = arith.addf %292, %293 : vector<8x32xf32>
    %295 = arith.negf %294 : vector<8x32xf32>
    %296 = math.exp %295 : vector<8x32xf32>
    %cst_102 = arith.constant 1.000000e+00 : f32
    %297 = vector.broadcast %cst_102 : f32 to vector<8x32xf32>
    %298 = arith.addf %297, %296 : vector<8x32xf32>
    %299 = arith.divf %297, %298 : vector<8x32xf32>
    %300 = vector.extract_strided_slice %278 {offsets = [0, 64], sizes = [8, 32], strides = [1, 1]} : vector<8x96xf32> to vector<8x32xf32>
    %301 = vector.extract_strided_slice %283 {offsets = [0, 64], sizes = [8, 32], strides = [1, 1]} : vector<8x96xf32> to vector<8x32xf32>
    %302 = arith.mulf %291, %301 : vector<8x32xf32>
    %303 = arith.addf %300, %302 : vector<8x32xf32>
    %304 = math.tanh %303 : vector<8x32xf32>
    %cst_103 = arith.constant 1.000000e+00 : f32
    %305 = vector.broadcast %cst_103 : f32 to vector<8x32xf32>
    %306 = arith.subf %305, %299 : vector<8x32xf32>
    %307 = arith.mulf %306, %304 : vector<8x32xf32>
    %308 = arith.mulf %299, %271 : vector<8x32xf32>
    %309 = arith.addf %307, %308 : vector<8x32xf32>
    %310 = arith.index_cast %c7_i32 : i32 to index
    %c0_104 = arith.constant 0 : index
    %c0_105 = arith.constant 0 : index
    %311 = vector.load %arg6[%310, %c0_104, %c0_105] : memref<8x8x32xf32, #tpu.memory_space<vmem>>, vector<1x8x32xf32>
    %312 = vector.shape_cast %311 : vector<1x8x32xf32> to vector<8x32xf32>
    %313 = vector.shape_cast %309 : vector<8x32xf32> to vector<1x8x32xf32>
    tpu.vector_store %arg6[%310, %c0_104, %c0_105], %313 {strides = array<i32>} : memref<8x8x32xf32, #tpu.memory_space<vmem>>, vector<1x8x32xf32>,
    %c8_i32 = arith.constant 8 : i32
    return
  }
  func.func @transform_0(%arg0: i32) -> (i32, i32, i32) {
    %c0_i32 = arith.constant 0 : i32
    %c0_i32_0 = arith.constant 0 : i32
    %c0_i32_1 = arith.constant 0 : i32
    %c0_i32_2 = arith.constant 0 : i32
    return %c0_i32, %c0_i32_0, %c0_i32_1 : i32, i32, i32
  }
  func.func @transform_1(%arg0: i32) -> (i32, i32) {
    %c0_i32 = arith.constant 0 : i32
    %c0_i32_0 = arith.constant 0 : i32
    %c0_i32_1 = arith.constant 0 : i32
    return %c0_i32, %c0_i32_0 : i32, i32
  }
  func.func @transform_2(%arg0: i32) -> (i32, i32) {
    %c0_i32 = arith.constant 0 : i32
    %c0_i32_0 = arith.constant 0 : i32
    %c0_i32_1 = arith.constant 0 : i32
    return %c0_i32, %c0_i32_0 : i32, i32
  }
  func.func @transform_3(%arg0: i32) -> (i32, i32) {
    %c0_i32 = arith.constant 0 : i32
    %c0_i32_0 = arith.constant 0 : i32
    %c0_i32_1 = arith.constant 0 : i32
    return %c0_i32, %c0_i32_0 : i32, i32
  }
  func.func @transform_4(%arg0: i32) -> (i32, i32) {
    %c0_i32 = arith.constant 0 : i32
    %c0_i32_0 = arith.constant 0 : i32
    %c0_i32_1 = arith.constant 0 : i32
    return %c0_i32, %c0_i32_0 : i32, i32
  }
  func.func @transform_5(%arg0: i32) -> (i32, i32, i32) {
    %c0_i32 = arith.constant 0 : i32
    %c0_i32_0 = arith.constant 0 : i32
    %c0_i32_1 = arith.constant 0 : i32
    %c0_i32_2 = arith.constant 0 : i32
    return %c0_i32, %c0_i32_0, %c0_i32_1 : i32, i32, i32
  }
}

module attributes {stable_mosaic.version = 11 : i64} {
  func.func @decoder_kernel(%arg0: i32, %arg1: memref<5xi32, #tpu.memory_space<smem>>, %arg2: memref<6x8x1xi32, #tpu.memory_space<vmem>>, %arg3: memref<8x8x32xf32, #tpu.memory_space<vmem>>, %arg4: memref<8x32xf32, #tpu.memory_space<vmem>>, %arg5: memref<128x32xf32, #tpu.memory_space<vmem>>, %arg6: memref<64x96xf32, #tpu.memory_space<vmem>>, %arg7: memref<32x96xf32, #tpu.memory_space<vmem>>, %arg8: memref<1x96xf32, #tpu.memory_space<vmem>>, %arg9: memref<1x96xf32, #tpu.memory_space<vmem>>, %arg10: memref<64x128xf32, #tpu.memory_space<vmem>>, %arg11: memref<1x128xf32, #tpu.memory_space<vmem>>, %arg12: memref<1x8x128xf32, #tpu.memory_space<vmem>>, %arg13: memref<8x32xf32, #tpu.memory_space<vmem>>, %arg14: memref<8x1xi32, #tpu.memory_space<vmem>>) attributes {dimension_semantics = [#tpu.dimension_semantics<arbitrary>], iteration_bounds = array<i64: 5>, scalar_prefetch = 1 : i64, scratch_operands = 2 : i64, tpu.core_type = #tpu.core_type<tc>, window_params = [{pipeline_mode = #tpu.pipeline_mode<synchronous>, transform_indices = @transform_0, window_bounds = array<i64: 6, 8, 1>}, {pipeline_mode = #tpu.pipeline_mode<synchronous>, transform_indices = @transform_1, window_bounds = array<i64: 8, 8, 32>}, {pipeline_mode = #tpu.pipeline_mode<synchronous>, transform_indices = @transform_2, window_bounds = array<i64: 8, 32>}, {pipeline_mode = #tpu.pipeline_mode<synchronous>, transform_indices = @transform_3, window_bounds = array<i64: 128, 32>}, {pipeline_mode = #tpu.pipeline_mode<synchronous>, transform_indices = @transform_4, window_bounds = array<i64: 64, 96>}, {pipeline_mode = #tpu.pipeline_mode<synchronous>, transform_indices = @transform_5, window_bounds = array<i64: 32, 96>}, {pipeline_mode = #tpu.pipeline_mode<synchronous>, transform_indices = @transform_6, window_bounds = array<i64: 1, 96>}, {pipeline_mode = #tpu.pipeline_mode<synchronous>, transform_indices = @transform_7, window_bounds = array<i64: 1, 96>}, {pipeline_mode = #tpu.pipeline_mode<synchronous>, transform_indices = @transform_8, window_bounds = array<i64: 64, 128>}, {pipeline_mode = #tpu.pipeline_mode<synchronous>, transform_indices = @transform_9, window_bounds = array<i64: 1, 128>}, {transform_indices = @transform_10, window_bounds = array<i64: 1, 8, 128>}]} {
    %c0_i32 = arith.constant 0 : i32
    %0 = arith.cmpi eq, %arg0, %c0_i32 : i32
    %1 = arith.extui %0 : i1 to i32
    %c0_i32_0 = arith.constant 0 : i32
    %2 = arith.cmpi ne, %1, %c0_i32_0 : i32
    scf.if %2 {
      %c0_42 = arith.constant 0 : index
      %c0_43 = arith.constant 0 : index
      %91 = vector.load %arg4[%c0_42, %c0_43] : memref<8x32xf32, #tpu.memory_space<vmem>>, vector<8x32xf32>
      %c0_44 = arith.constant 0 : index
      %c0_45 = arith.constant 0 : index
      %92 = vector.load %arg13[%c0_44, %c0_45] : memref<8x32xf32, #tpu.memory_space<vmem>>, vector<8x32xf32>
      tpu.vector_store %arg13[%c0_44, %c0_45], %91 {strides = array<i32>} : memref<8x32xf32, #tpu.memory_space<vmem>>, vector<8x32xf32>,
      %c0_i32_46 = arith.constant 0 : i32
      %93 = vector.broadcast %c0_i32_46 : i32 to vector<8x1xi32>
      %c0_47 = arith.constant 0 : index
      %c0_48 = arith.constant 0 : index
      %94 = vector.load %arg14[%c0_47, %c0_48] : memref<8x1xi32, #tpu.memory_space<vmem>>, vector<8x1xi32>
      tpu.vector_store %arg14[%c0_47, %c0_48], %93 {strides = array<i32>} : memref<8x1xi32, #tpu.memory_space<vmem>>, vector<8x1xi32>,
    } else {
    }
    %3 = arith.index_cast %arg0 : i32 to index
    %4 = memref.load %arg1[%3] : memref<5xi32, #tpu.memory_space<smem>>
    %c1_i32 = arith.constant 1 : i32
    %5 = arith.cmpi eq, %4, %c1_i32 : i32
    %c0 = arith.constant 0 : index
    %c0_1 = arith.constant 0 : index
    %6 = vector.load %arg14[%c0, %c0_1] : memref<8x1xi32, #tpu.memory_space<vmem>>, vector<8x1xi32>
    %7 = arith.index_cast %arg0 : i32 to index
    %c0_2 = arith.constant 0 : index
    %c0_3 = arith.constant 0 : index
    %8 = vector.load %arg2[%7, %c0_2, %c0_3] : memref<6x8x1xi32, #tpu.memory_space<vmem>>, vector<1x8x1xi32>
    %9 = vector.shape_cast %8 : vector<1x8x1xi32> to vector<8x1xi32>
    %10 = arith.select %5, %6, %9 : vector<8x1xi32>
    %11 = tpu.iota {dimensions = array<i32: 1>} : vector<8x128xi32>
    %12 = vector.broadcast %10 : vector<8x1xi32> to vector<8x128xi32>
    %13 = arith.cmpi eq, %12, %11 : vector<8x128xi32>
    %14 = arith.extui %13 : vector<8x128xi1> to vector<8x128xi32>
    %15 = arith.sitofp %14 : vector<8x128xi32> to vector<8x128xf32>
    %c0_4 = arith.constant 0 : index
    %c0_5 = arith.constant 0 : index
    %16 = vector.load %arg5[%c0_4, %c0_5] : memref<128x32xf32, #tpu.memory_space<vmem>>, vector<128x32xf32>
    %cst = arith.constant dense<0.000000e+00> : vector<8x32xf32>
    %17 = tpu.matmul %15, %16, %cst {dimension_numbers = #tpu.dot_dimension_numbers<[1], [0], [0], [1], [0, 0, 1, 1], [], []>} : vector<8x128xf32>, vector<128x32xf32>, vector<8x32xf32> -> vector<8x32xf32>
    %c0_6 = arith.constant 0 : index
    %c0_7 = arith.constant 0 : index
    %18 = vector.load %arg13[%c0_6, %c0_7] : memref<8x32xf32, #tpu.memory_space<vmem>>, vector<8x32xf32>
    %c0_8 = arith.constant 0 : index
    %c0_9 = arith.constant 0 : index
    %c0_10 = arith.constant 0 : index
    %19 = vector.load %arg3[%c0_8, %c0_9, %c0_10] : memref<8x8x32xf32, #tpu.memory_space<vmem>>, vector<8x8x32xf32>
    %20 = vector.shape_cast %18 : vector<8x32xf32> to vector<8x1x32xf32>
    "tpu.trace_start"() <{level = 10 : i32, message = "bqh,bsh->bqs"}> : () -> ()
    %cst_11 = arith.constant dense<0.000000e+00> : vector<8x1x8xf32>
    %21 = tpu.matmul %20, %19, %cst_11 {dimension_numbers = #tpu.dot_dimension_numbers<[2], [2], [1], [1], [0, 0, 0, 1, 1, 1], [0], [0]>} : vector<8x1x32xf32>, vector<8x8x32xf32>, vector<8x1x8xf32> -> vector<8x1x8xf32>
    "tpu.trace_stop"() : () -> ()
    %cst_12 = arith.constant dense<0xFF800000> : vector<8x1xf32>
    %22 = vector.multi_reduction <maximumf>, %21, %cst_12 [2] : vector<8x1x8xf32> to vector<8x1xf32>
    %23 = vector.shape_cast %22 : vector<8x1xf32> to vector<8x1x1xf32>
    %24 = vector.broadcast %23 : vector<8x1x1xf32> to vector<8x1x8xf32>
    %25 = arith.subf %21, %24 : vector<8x1x8xf32>
    %26 = math.exp %25 : vector<8x1x8xf32>
    %cst_13 = arith.constant dense<0.000000e+00> : vector<8x1xf32>
    %27 = vector.multi_reduction <add>, %26, %cst_13 [2] : vector<8x1x8xf32> to vector<8x1xf32>
    %28 = vector.shape_cast %27 : vector<8x1xf32> to vector<8x1x1xf32>
    %29 = tpu.reciprocal %28 {approx = true} : vector<8x1x1xf32> -> vector<8x1x1xf32>
    %30 = vector.broadcast %29 : vector<8x1x1xf32> to vector<8x1x8xf32>
    %31 = arith.mulf %26, %30 : vector<8x1x8xf32>
    "tpu.trace_start"() <{level = 10 : i32, message = "bqs,bsh->bqh"}> : () -> ()
    %cst_14 = arith.constant dense<0.000000e+00> : vector<8x1x32xf32>
    %32 = tpu.matmul %31, %19, %cst_14 {dimension_numbers = #tpu.dot_dimension_numbers<[2], [1], [1], [2], [0, 0, 0, 1, 1, 2], [0], [0]>} : vector<8x1x8xf32>, vector<8x8x32xf32>, vector<8x1x32xf32> -> vector<8x1x32xf32>
    "tpu.trace_stop"() : () -> ()
    %33 = vector.shape_cast %32 : vector<8x1x32xf32> to vector<8x32xf32>
    %34 = tpu.concatenate %17, %33 in 1 : vector<8x32xf32>, vector<8x32xf32> -> vector<8x64xf32>
    %c0_15 = arith.constant 0 : index
    %c0_16 = arith.constant 0 : index
    %35 = vector.load %arg6[%c0_15, %c0_16] : memref<64x96xf32, #tpu.memory_space<vmem>>, vector<64x96xf32>
    %cst_17 = arith.constant dense<0.000000e+00> : vector<8x96xf32>
    %36 = tpu.matmul %34, %35, %cst_17 {dimension_numbers = #tpu.dot_dimension_numbers<[1], [0], [0], [1], [0, 0, 1, 1], [], []>} : vector<8x64xf32>, vector<64x96xf32>, vector<8x96xf32> -> vector<8x96xf32>
    %c0_18 = arith.constant 0 : index
    %c0_19 = arith.constant 0 : index
    %37 = vector.load %arg8[%c0_18, %c0_19] : memref<1x96xf32, #tpu.memory_space<vmem>>, vector<1x96xf32>
    %38 = vector.broadcast %37 : vector<1x96xf32> to vector<8x96xf32>
    %39 = arith.addf %36, %38 : vector<8x96xf32>
    %c0_20 = arith.constant 0 : index
    %c0_21 = arith.constant 0 : index
    %40 = vector.load %arg7[%c0_20, %c0_21] : memref<32x96xf32, #tpu.memory_space<vmem>>, vector<32x96xf32>
    %cst_22 = arith.constant dense<0.000000e+00> : vector<8x96xf32>
    %41 = tpu.matmul %18, %40, %cst_22 {dimension_numbers = #tpu.dot_dimension_numbers<[1], [0], [0], [1], [0, 0, 1, 1], [], []>} : vector<8x32xf32>, vector<32x96xf32>, vector<8x96xf32> -> vector<8x96xf32>
    %c0_23 = arith.constant 0 : index
    %c0_24 = arith.constant 0 : index
    %42 = vector.load %arg9[%c0_23, %c0_24] : memref<1x96xf32, #tpu.memory_space<vmem>>, vector<1x96xf32>
    %43 = vector.broadcast %42 : vector<1x96xf32> to vector<8x96xf32>
    %44 = arith.addf %41, %43 : vector<8x96xf32>
    %45 = vector.extract_strided_slice %39 {offsets = [0, 0], sizes = [8, 32], strides = [1, 1]} : vector<8x96xf32> to vector<8x32xf32>
    %46 = vector.extract_strided_slice %44 {offsets = [0, 0], sizes = [8, 32], strides = [1, 1]} : vector<8x96xf32> to vector<8x32xf32>
    %47 = arith.addf %45, %46 : vector<8x32xf32>
    %48 = arith.negf %47 : vector<8x32xf32>
    %49 = math.exp %48 : vector<8x32xf32>
    %cst_25 = arith.constant 1.000000e+00 : f32
    %50 = vector.broadcast %cst_25 : f32 to vector<8x32xf32>
    %51 = arith.addf %50, %49 : vector<8x32xf32>
    %52 = arith.divf %50, %51 : vector<8x32xf32>
    %53 = vector.extract_strided_slice %39 {offsets = [0, 32], sizes = [8, 32], strides = [1, 1]} : vector<8x96xf32> to vector<8x32xf32>
    %54 = vector.extract_strided_slice %44 {offsets = [0, 32], sizes = [8, 32], strides = [1, 1]} : vector<8x96xf32> to vector<8x32xf32>
    %55 = arith.addf %53, %54 : vector<8x32xf32>
    %56 = arith.negf %55 : vector<8x32xf32>
    %57 = math.exp %56 : vector<8x32xf32>
    %cst_26 = arith.constant 1.000000e+00 : f32
    %58 = vector.broadcast %cst_26 : f32 to vector<8x32xf32>
    %59 = arith.addf %58, %57 : vector<8x32xf32>
    %60 = arith.divf %58, %59 : vector<8x32xf32>
    %61 = vector.extract_strided_slice %39 {offsets = [0, 64], sizes = [8, 32], strides = [1, 1]} : vector<8x96xf32> to vector<8x32xf32>
    %62 = vector.extract_strided_slice %44 {offsets = [0, 64], sizes = [8, 32], strides = [1, 1]} : vector<8x96xf32> to vector<8x32xf32>
    %63 = arith.mulf %52, %62 : vector<8x32xf32>
    %64 = arith.addf %61, %63 : vector<8x32xf32>
    %65 = math.tanh %64 : vector<8x32xf32>
    %cst_27 = arith.constant 1.000000e+00 : f32
    %66 = vector.broadcast %cst_27 : f32 to vector<8x32xf32>
    %67 = arith.subf %66, %60 : vector<8x32xf32>
    %68 = arith.mulf %67, %65 : vector<8x32xf32>
    %69 = arith.mulf %60, %18 : vector<8x32xf32>
    %70 = arith.addf %68, %69 : vector<8x32xf32>
    %71 = tpu.concatenate %70, %33 in 1 : vector<8x32xf32>, vector<8x32xf32> -> vector<8x64xf32>
    %c0_28 = arith.constant 0 : index
    %c0_29 = arith.constant 0 : index
    %72 = vector.load %arg10[%c0_28, %c0_29] : memref<64x128xf32, #tpu.memory_space<vmem>>, vector<64x128xf32>
    %cst_30 = arith.constant dense<0.000000e+00> : vector<8x128xf32>
    %73 = tpu.matmul %71, %72, %cst_30 {dimension_numbers = #tpu.dot_dimension_numbers<[1], [0], [0], [1], [0, 0, 1, 1], [], []>} : vector<8x64xf32>, vector<64x128xf32>, vector<8x128xf32> -> vector<8x128xf32>
    %c0_31 = arith.constant 0 : index
    %c0_32 = arith.constant 0 : index
    %74 = vector.load %arg11[%c0_31, %c0_32] : memref<1x128xf32, #tpu.memory_space<vmem>>, vector<1x128xf32>
    %75 = vector.broadcast %74 : vector<1x128xf32> to vector<8x128xf32>
    %76 = arith.addf %73, %75 : vector<8x128xf32>
    %77 = tpu.iota {dimensions = array<i32: 1>} : vector<8x128xi32>
    %cst_33 = arith.constant dense<0xFF800000> : vector<8xf32>
    %78 = vector.multi_reduction <maximumf>, %76, %cst_33 [1] : vector<8x128xf32> to vector<8xf32>
    %79 = vector.shape_cast %78 : vector<8xf32> to vector<8x1xf32>
    %80 = vector.broadcast %79 : vector<8x1xf32> to vector<8x128xf32>
    %81 = arith.cmpf oeq, %76, %80 : vector<8x128xf32>
    %c128_i32 = arith.constant 128 : i32
    %82 = vector.broadcast %c128_i32 : i32 to vector<8x128xi32>
    %83 = arith.select %81, %77, %82 : vector<8x128xi1>, vector<8x128xi32>
    %cst_34 = arith.constant dense<2147483647> : vector<8xi32>
    %84 = vector.multi_reduction <minsi>, %83, %cst_34 [1] : vector<8x128xi32> to vector<8xi32>
    %85 = vector.shape_cast %84 : vector<8xi32> to vector<8x1xi32>
    %c0_35 = arith.constant 0 : index
    %c0_36 = arith.constant 0 : index
    %86 = vector.load %arg13[%c0_35, %c0_36] : memref<8x32xf32, #tpu.memory_space<vmem>>, vector<8x32xf32>
    tpu.vector_store %arg13[%c0_35, %c0_36], %70 {strides = array<i32>} : memref<8x32xf32, #tpu.memory_space<vmem>>, vector<8x32xf32>,
    %c0_37 = arith.constant 0 : index
    %c0_38 = arith.constant 0 : index
    %87 = vector.load %arg14[%c0_37, %c0_38] : memref<8x1xi32, #tpu.memory_space<vmem>>, vector<8x1xi32>
    tpu.vector_store %arg14[%c0_37, %c0_38], %85 {strides = array<i32>} : memref<8x1xi32, #tpu.memory_space<vmem>>, vector<8x1xi32>,
    %c0_39 = arith.constant 0 : index
    %c0_40 = arith.constant 0 : index
    %c0_41 = arith.constant 0 : index
    %88 = vector.load %arg12[%c0_39, %c0_40, %c0_41] : memref<1x8x128xf32, #tpu.memory_space<vmem>>, vector<1x8x128xf32>
    %89 = vector.shape_cast %88 : vector<1x8x128xf32> to vector<8x128xf32>
    %90 = vector.shape_cast %76 : vector<8x128xf32> to vector<1x8x128xf32>
    tpu.vector_store %arg12[%c0_39, %c0_40, %c0_41], %90 {strides = array<i32>} : memref<1x8x128xf32, #tpu.memory_space<vmem>>, vector<1x8x128xf32>,
    return
  }
  func.func @transform_0(%arg0: i32, %arg1: memref<5xi32, #tpu.memory_space<smem>>) -> (i32, i32, i32) {
    %c0_i32 = arith.constant 0 : i32
    %c0_i32_0 = arith.constant 0 : i32
    %c0_i32_1 = arith.constant 0 : i32
    %c0_i32_2 = arith.constant 0 : i32
    return %c0_i32, %c0_i32_0, %c0_i32_1 : i32, i32, i32
  }
  func.func @transform_1(%arg0: i32, %arg1: memref<5xi32, #tpu.memory_space<smem>>) -> (i32, i32, i32) {
    %c0_i32 = arith.constant 0 : i32
    %c0_i32_0 = arith.constant 0 : i32
    %c0_i32_1 = arith.constant 0 : i32
    %c0_i32_2 = arith.constant 0 : i32
    return %c0_i32, %c0_i32_0, %c0_i32_1 : i32, i32, i32
  }
  func.func @transform_2(%arg0: i32, %arg1: memref<5xi32, #tpu.memory_space<smem>>) -> (i32, i32) {
    %c0_i32 = arith.constant 0 : i32
    %c0_i32_0 = arith.constant 0 : i32
    %c0_i32_1 = arith.constant 0 : i32
    return %c0_i32, %c0_i32_0 : i32, i32
  }
  func.func @transform_3(%arg0: i32, %arg1: memref<5xi32, #tpu.memory_space<smem>>) -> (i32, i32) {
    %c0_i32 = arith.constant 0 : i32
    %c0_i32_0 = arith.constant 0 : i32
    %c0_i32_1 = arith.constant 0 : i32
    return %c0_i32, %c0_i32_0 : i32, i32
  }
  func.func @transform_4(%arg0: i32, %arg1: memref<5xi32, #tpu.memory_space<smem>>) -> (i32, i32) {
    %c0_i32 = arith.constant 0 : i32
    %c0_i32_0 = arith.constant 0 : i32
    %c0_i32_1 = arith.constant 0 : i32
    return %c0_i32, %c0_i32_0 : i32, i32
  }
  func.func @transform_5(%arg0: i32, %arg1: memref<5xi32, #tpu.memory_space<smem>>) -> (i32, i32) {
    %c0_i32 = arith.constant 0 : i32
    %c0_i32_0 = arith.constant 0 : i32
    %c0_i32_1 = arith.constant 0 : i32
    return %c0_i32, %c0_i32_0 : i32, i32
  }
  func.func @transform_6(%arg0: i32, %arg1: memref<5xi32, #tpu.memory_space<smem>>) -> (i32, i32) {
    %c0_i32 = arith.constant 0 : i32
    %c0_i32_0 = arith.constant 0 : i32
    %c0_i32_1 = arith.constant 0 : i32
    return %c0_i32, %c0_i32_0 : i32, i32
  }
  func.func @transform_7(%arg0: i32, %arg1: memref<5xi32, #tpu.memory_space<smem>>) -> (i32, i32) {
    %c0_i32 = arith.constant 0 : i32
    %c0_i32_0 = arith.constant 0 : i32
    %c0_i32_1 = arith.constant 0 : i32
    return %c0_i32, %c0_i32_0 : i32, i32
  }
  func.func @transform_8(%arg0: i32, %arg1: memref<5xi32, #tpu.memory_space<smem>>) -> (i32, i32) {
    %c0_i32 = arith.constant 0 : i32
    %c0_i32_0 = arith.constant 0 : i32
    %c0_i32_1 = arith.constant 0 : i32
    return %c0_i32, %c0_i32_0 : i32, i32
  }
  func.func @transform_9(%arg0: i32, %arg1: memref<5xi32, #tpu.memory_space<smem>>) -> (i32, i32) {
    %c0_i32 = arith.constant 0 : i32
    %c0_i32_0 = arith.constant 0 : i32
    %c0_i32_1 = arith.constant 0 : i32
    return %c0_i32, %c0_i32_0 : i32, i32
  }
  func.func @transform_10(%arg0: i32, %arg1: memref<5xi32, #tpu.memory_space<smem>>) -> (i32, i32, i32) {
    %c0_i32 = arith.constant 0 : i32
    %c0_i32_0 = arith.constant 0 : i32
    %c0_i32_1 = arith.constant 0 : i32
    return %arg0, %c0_i32, %c0_i32_0 : i32, i32, i32
  }
}

</mosaic_0001>

<llo_original>
// kernel: _seq2seq_core.2
$region0: #{_seq2seq_core.2}
  #allocation0 [shape = 'u32[]', space=smem, size = 0x4, offset = 0x4, fixed_abs, tag = 'smem constant byte address 0x4 - core index']
  #allocation1 [shape = 'u32[72,128]{1,0:T(1,128)}', space=vmem, size = 0x9000, scoped, tag = 'internal scratch']
  #allocation2 [shape = 'f32[8,8,96]{2,1,0:T(8,128)}', space=vmem, size = 0x8000, scoped, tag = 'scratch operand']
  %s0 = inlined_call_operand.vmem [shape: f32[8,8,32], index: 0, kind: input, shape index: {}]
  %s1 = inlined_call_operand.vmem [shape: f32[32,96], index: 1, kind: input, shape index: {}]
  %s2 = inlined_call_operand.vmem [shape: f32[32,96], index: 2, kind: input, shape index: {}]
  %s3 = inlined_call_operand.vmem [shape: f32[1,96], index: 3, kind: input, shape index: {}]
  %s4 = inlined_call_operand.vmem [shape: f32[1,96], index: 4, kind: input, shape index: {}]
  %s5 = inlined_call_operand.vmem [shape: f32[8,8,32], index: 5, kind: output, shape index: {}]
  %s6 = sld [smem:[#allocation0]]
  $region30: #{_seq2seq_core.2} parent=0
    _
  %s8 = ssub.s32 1, %s6
  %s9 = scalar_select 0, %s8, %s6
  // Predicated region
  $region2: #{_seq2seq_core.2} parent=0 // pred_check
    _
  $region3: #{_seq2seq_core.2} parent=0 // pred_check_branch
    %11 = sbr.rel (0) target = $region5
  $region4: #{_seq2seq_core.2} parent=0 // pred_region
    _
  $region5: #{_seq2seq_core.2} parent=0 // pred_fallthru
    _
  // Predicated region
  $region6: #{_seq2seq_core.2} parent=0 // pred_check
    _
  $region7: #{_seq2seq_core.2} parent=0 // pred_check_branch
    %13 = sbr.rel (0) target = $region9
  $region8: #{_seq2seq_core.2} parent=0 // pred_region
    _
  $region9: #{_seq2seq_core.2} parent=0 // pred_fallthru
    _
  // Predicated region
  $region10: #{_seq2seq_core.2} parent=0 // pred_check
    _
  $region11: #{_seq2seq_core.2} parent=0 // pred_check_branch
    %15 = sbr.rel (0) target = $region13
  $region12: #{_seq2seq_core.2} parent=0 // pred_region
    _
  $region13: #{_seq2seq_core.2} parent=0 // pred_fallthru
    _
  // Predicated region
  $region14: #{_seq2seq_core.2} parent=0 // pred_check
    _
  $region15: #{_seq2seq_core.2} parent=0 // pred_check_branch
    %17 = sbr.rel (0) target = $region17
  $region16: #{_seq2seq_core.2} parent=0 // pred_region
    _
  $region17: #{_seq2seq_core.2} parent=0 // pred_fallthru
    _
  // Predicated region
  $region18: #{_seq2seq_core.2} parent=0 // pred_check
    _
  $region19: #{_seq2seq_core.2} parent=0 // pred_check_branch
    %19 = sbr.rel (0) target = $region21
  $region20: #{_seq2seq_core.2} parent=0 // pred_region
    _
  $region21: #{_seq2seq_core.2} parent=0 // pred_fallthru
    _
  %v20 = vld [vmem:[%s0] sm:$0xff]
  %v21 = vld [vmem:[%s0 + $0x8] sm:$0xff]
  %v22 = vld [vmem:[%s0 + $0x10] sm:$0xff]
  %v23 = vld [vmem:[%s0 + $0x18] sm:$0xff]
  %v24 = vld [vmem:[%s0 + $0x20] sm:$0xff]
  %v25 = vld [vmem:[%s0 + $0x28] sm:$0xff]
  %v26 = vld [vmem:[%s0 + $0x30] sm:$0xff]
  %v27 = vld [vmem:[%s0 + $0x38] sm:$0xff]
  %v28 = vld [vmem:[%s1] sm:$0xff]
  %v29 = vld [vmem:[%s1 + $0x8] sm:$0xff]
  %v30 = vld [vmem:[%s1 + $0x10] sm:$0xff]
  %v31 = vld [vmem:[%s1 + $0x18] sm:$0xff]
  %v32 = vld [vmem:[%s3] sm:$0x1]
  %v34 = vperm.slane %v32, 0
  %vm36 = vcmask 261120
  %v38 = vsel %vm36, %v20, 0
  %v41 = vsel %vm36, %v21, 0
  %v44 = vsel %vm36, %v22, 0
  %v47 = vsel %vm36, %v23, 0
  %v50 = vsel %vm36, %v24, 0
  %v53 = vsel %vm36, %v25, 0
  %v56 = vsel %vm36, %v26, 0
  %v59 = vsel %vm36, %v27, 0
  %61 = vmatpush.msra.mxu0 0.0
  %62 = vmatpush.msra.mxu0 0.0
  %63 = vmatpush.msra.mxu0 0.0
  %64 = vmatpush.msra.mxu0 0.0
  %65 = vmatpush.msra.mxu0 0.0
  %66 = vmatpush.msra.mxu0 0.0
  %67 = vmatpush.msra.mxu0 0.0
  %68 = vmatpush.msra.mxu0 0.0
  %69 = vmatpush.msra.mxu0 0.0
  %70 = vmatpush.msra.mxu0 0.0
  %71 = vmatpush.msra.mxu0 0.0
  %72 = vmatpush.msra.mxu0 0.0
  %73 = vmatpush.msra.mxu0 %v31
  %74 = vmatpush.msra.mxu0 %v30
  %75 = vmatpush.msra.mxu0 %v29
  %76 = vmatpush.msra.mxu0 %v28
  %77 = vmatmul.f32.gmra.mxu0 %v38
  %v78 = vpop.f32.mrf.mxu0
  %v79 = vadd.f32 %v34, %v78
  %80 = vmatmul.f32.gmra.mxu0 %v41
  %v81 = vpop.f32.mrf.mxu0
  %v82 = vadd.f32 %v34, %v81
  %83 = vmatmul.f32.gmra.mxu0 %v44
  %v84 = vpop.f32.mrf.mxu0
  %v85 = vadd.f32 %v34, %v84
  %86 = vmatmul.f32.gmra.mxu0 %v47
  %v87 = vpop.f32.mrf.mxu0
  %v88 = vadd.f32 %v34, %v87
  %89 = vmatmul.f32.gmra.mxu0 %v50
  %v90 = vpop.f32.mrf.mxu0
  %v91 = vadd.f32 %v34, %v90
  %92 = vmatmul.f32.gmra.mxu0 %v53
  %v93 = vpop.f32.mrf.mxu0
  %v94 = vadd.f32 %v34, %v93
  %95 = vmatmul.f32.gmra.mxu0 %v56
  %v96 = vpop.f32.mrf.mxu0
  %v97 = vadd.f32 %v34, %v96
  %98 = vmatmul.f32.gmra.mxu0 %v59
  %v99 = vpop.f32.mrf.mxu0
  %v100 = vadd.f32 %v34, %v99
  %101 = vdwg.mxu0
  %vm102 = vcmask 785408
  %103 = vst.msk [vmem:[#allocation2] sm:$0xff] %vm102, %v79
  %104 = vst.msk [vmem:[#allocation2 + $0x8] sm:$0xff] %vm102, %v82
  %105 = vst.msk [vmem:[#allocation2 + $0x10] sm:$0xff] %vm102, %v85
  %106 = vst.msk [vmem:[#allocation2 + $0x18] sm:$0xff] %vm102, %v88
  %107 = vst.msk [vmem:[#allocation2 + $0x20] sm:$0xff] %vm102, %v91
  %108 = vst.msk [vmem:[#allocation2 + $0x28] sm:$0xff] %vm102, %v94
  %109 = vst.msk [vmem:[#allocation2 + $0x30] sm:$0xff] %vm102, %v97
  %110 = vst.msk [vmem:[#allocation2 + $0x38] sm:$0xff] %vm102, %v100
  %v111 = vld [vmem:[#allocation2] sm:$0xff]
  %v112 = vld [vmem:[%s2] sm:$0xff]
  %v113 = vld [vmem:[%s2 + $0x8] sm:$0xff]
  %v114 = vld [vmem:[%s2 + $0x10] sm:$0xff]
  %v115 = vld [vmem:[%s2 + $0x18] sm:$0xff]
  %v116 = vld [vmem:[%s4] sm:$0x1]
  %v118 = vperm.slane %v116, 0
  %v121 = vsel %vm36, 0.0, 0
  %123 = vmatpush.msra.mxu0 0.0
  %124 = vmatpush.msra.mxu0 0.0
  %125 = vmatpush.msra.mxu0 0.0
  %126 = vmatpush.msra.mxu0 0.0
  %127 = vmatpush.msra.mxu0 0.0
  %128 = vmatpush.msra.mxu0 0.0
  %129 = vmatpush.msra.mxu0 0.0
  %130 = vmatpush.msra.mxu0 0.0
  %131 = vmatpush.msra.mxu0 0.0
  %132 = vmatpush.msra.mxu0 0.0
  %133 = vmatpush.msra.mxu0 0.0
  %134 = vmatpush.msra.mxu0 0.0
  %135 = vmatpush.msra.mxu0 %v115
  %136 = vmatpush.msra.mxu0 %v114
  %137 = vmatpush.msra.mxu0 %v113
  %138 = vmatpush.msra.mxu0 %v112
  %139 = vmatmul.f32.gmra.mxu0 %v121
  %v140 = vpop.f32.mrf.mxu0
  %v141 = vadd.f32 %v118, %v140
  %142 = vdwg.mxu0
  %v143 = vadd.f32 %v111, %v141
  %v144 = vxor.u32 %v143, 2147483648
  %v145 = vmul.f32 %v144, 1.442695
  %v146 = vpow.pop %v145
  %v147 = vadd.f32 %v146, 1.0
  %v148 = vrcp.pop %v147
  %v149 = vmul.f32 %v147, %v148
  %v150 = vsub.f32 1.0, %v149
  %v151 = vmul.f32 %v148, %v150
  %v152 = vadd.f32 %v148, %v151
  %vm153 = vweird.f32 %v147
  %vm154 = vweird.f32 %v148
  %vm155 = vmor %vm153, %vm154
  %v156 = vsel %vm155, %v148, %v152
  %v157 = vand.u32 2147483647, %v147
  %vm158 = vcmp.eq.f32.partialorder %v157, 8.507059e+37
  %v159 = vand.u32 %v147, 2147483648
  %v160 = vor.u32 1.1754944e-38, %v159
  %v161 = vsel %vm158, %v160, %v156
  %v162 = vmul.f32 1.0, %v161
  %164 = vrot.lane.b32.xlu0 %v141, 64
  %v165 = vpop.permute.xlu0 %164
  %v167 = vmul.f32 %v162, %v165
  %169 = vrot.lane.b32.xlu0 %v167, 64
  %v170 = vpop.permute.xlu0 %169
  %v172 = vadd.f32 %v111, %v170
  %v173 = vtanh.pop %v172
  %v174 = vsub.f32 1.0, %v162
  %176 = vrot.lane.b32.xlu0 %v173, 96
  %v177 = vpop.permute.xlu0 %176
  %v179 = vmul.f32 %v174, %v177
  %v180 = vmul.f32 %v162, 0.0
  %v181 = vadd.f32 %v179, %v180
  %183 = vrot.lane.b32.xlu0 %v181, 96
  %v184 = vpop.permute.xlu0 %183
  %186 = vst.msk [vmem:[%s5] sm:$0xff] %vm36, %v184
  %s187 = scalar_lea.vmem [#allocation2], 8
  %v188 = vld [vmem:[%s187] sm:$0xff]
  %v189 = vld [vmem:[%s2] sm:$0xff]
  %v190 = vld [vmem:[%s2 + $0x8] sm:$0xff]
  %v191 = vld [vmem:[%s2 + $0x10] sm:$0xff]
  %v192 = vld [vmem:[%s2 + $0x18] sm:$0xff]
  %v193 = vld [vmem:[%s4] sm:$0x1]
  %v195 = vperm.slane %v193, 0
  %v197 = vsel %vm36, %v184, 0
  %199 = vmatpush.msra.mxu0 0.0
  %200 = vmatpush.msra.mxu0 0.0
  %201 = vmatpush.msra.mxu0 0.0
  %202 = vmatpush.msra.mxu0 0.0
  %203 = vmatpush.msra.mxu0 0.0
  %204 = vmatpush.msra.mxu0 0.0
  %205 = vmatpush.msra.mxu0 0.0
  %206 = vmatpush.msra.mxu0 0.0
  %207 = vmatpush.msra.mxu0 0.0
  %208 = vmatpush.msra.mxu0 0.0
  %209 = vmatpush.msra.mxu0 0.0
  %210 = vmatpush.msra.mxu0 0.0
  %211 = vmatpush.msra.mxu0 %v192
  %212 = vmatpush.msra.mxu0 %v191
  %213 = vmatpush.msra.mxu0 %v190
  %214 = vmatpush.msra.mxu0 %v189
  %215 = vmatmul.f32.gmra.mxu0 %v197
  %v216 = vpop.f32.mrf.mxu0
  %v217 = vadd.f32 %v195, %v216
  %218 = vdwg.mxu0
  %v219 = vadd.f32 %v188, %v217
  %v220 = vxor.u32 %v219, 2147483648
  %v221 = vmul.f32 %v220, 1.442695
  %v222 = vpow.pop %v221
  %v223 = vadd.f32 %v222, 1.0
  %v224 = vrcp.pop %v223
  %v225 = vmul.f32 %v223, %v224
  %v226 = vsub.f32 1.0, %v225
  %v227 = vmul.f32 %v224, %v226
  %v228 = vadd.f32 %v224, %v227
  %vm229 = vweird.f32 %v223
  %vm230 = vweird.f32 %v224
  %vm231 = vmor %vm229, %vm230
  %v232 = vsel %vm231, %v224, %v228
  %v233 = vand.u32 2147483647, %v223
  %vm234 = vcmp.eq.f32.partialorder %v233, 8.507059e+37
  %v235 = vand.u32 %v223, 2147483648
  %v236 = vor.u32 1.1754944e-38, %v235
  %v237 = vsel %vm234, %v236, %v232
  %v238 = vmul.f32 1.0, %v237
  %240 = vrot.lane.b32.xlu0 %v217, 64
  %v241 = vpop.permute.xlu0 %240
  %v243 = vmul.f32 %v238, %v241
  %245 = vrot.lane.b32.xlu0 %v243, 64
  %v246 = vpop.permute.xlu0 %245
  %v248 = vadd.f32 %v188, %v246
  %v249 = vtanh.pop %v248
  %v250 = vsub.f32 1.0, %v238
  %252 = vrot.lane.b32.xlu0 %v249, 96
  %v253 = vpop.permute.xlu0 %252
  %v255 = vmul.f32 %v250, %v253
  %v256 = vmul.f32 %v238, %v181
  %v257 = vadd.f32 %v255, %v256
  %259 = vrot.lane.b32.xlu0 %v257, 96
  %v260 = vpop.permute.xlu0 %259
  %s262 = scalar_lea.vmem %s5, 8
  %263 = vst.msk [vmem:[%s262] sm:$0xff] %vm36, %v260
  %s264 = scalar_lea.vmem [#allocation2], 16
  %v265 = vld [vmem:[%s264] sm:$0xff]
  %v266 = vld [vmem:[%s2] sm:$0xff]
  %v267 = vld [vmem:[%s2 + $0x8] sm:$0xff]
  %v268 = vld [vmem:[%s2 + $0x10] sm:$0xff]
  %v269 = vld [vmem:[%s2 + $0x18] sm:$0xff]
  %v270 = vld [vmem:[%s4] sm:$0x1]
  %v272 = vperm.slane %v270, 0
  %v274 = vsel %vm36, %v260, 0
  %276 = vmatpush.msra.mxu0 0.0
  %277 = vmatpush.msra.mxu0 0.0
  %278 = vmatpush.msra.mxu0 0.0
  %279 = vmatpush.msra.mxu0 0.0
  %280 = vmatpush.msra.mxu0 0.0
  %281 = vmatpush.msra.mxu0 0.0
  %282 = vmatpush.msra.mxu0 0.0
  %283 = vmatpush.msra.mxu0 0.0
  %284 = vmatpush.msra.mxu0 0.0
  %285 = vmatpush.msra.mxu0 0.0
  %286 = vmatpush.msra.mxu0 0.0
  %287 = vmatpush.msra.mxu0 0.0
  %288 = vmatpush.msra.mxu0 %v269
  %289 = vmatpush.msra.mxu0 %v268
  %290 = vmatpush.msra.mxu0 %v267
  %291 = vmatpush.msra.mxu0 %v266
  %292 = vmatmul.f32.gmra.mxu0 %v274
  %v293 = vpop.f32.mrf.mxu0
  %v294 = vadd.f32 %v272, %v293
  %295 = vdwg.mxu0
  %v296 = vadd.f32 %v265, %v294
  %v297 = vxor.u32 %v296, 2147483648
  %v298 = vmul.f32 %v297, 1.442695
  %v299 = vpow.pop %v298
  %v300 = vadd.f32 %v299, 1.0
  %v301 = vrcp.pop %v300
  %v302 = vmul.f32 %v300, %v301
  %v303 = vsub.f32 1.0, %v302
  %v304 = vmul.f32 %v301, %v303
  %v305 = vadd.f32 %v301, %v304
  %vm306 = vweird.f32 %v300
  %vm307 = vweird.f32 %v301
  %vm308 = vmor %vm306, %vm307
  %v309 = vsel %vm308, %v301, %v305
  %v310 = vand.u32 2147483647, %v300
  %vm311 = vcmp.eq.f32.partialorder %v310, 8.507059e+37
  %v312 = vand.u32 %v300, 2147483648
  %v313 = vor.u32 1.1754944e-38, %v312
  %v314 = vsel %vm311, %v313, %v309
  %v315 = vmul.f32 1.0, %v314
  %317 = vrot.lane.b32.xlu0 %v294, 64
  %v318 = vpop.permute.xlu0 %317
  %v320 = vmul.f32 %v315, %v318
  %322 = vrot.lane.b32.xlu0 %v320, 64
  %v323 = vpop.permute.xlu0 %322
  %v325 = vadd.f32 %v265, %v323
  %v326 = vtanh.pop %v325
  %v327 = vsub.f32 1.0, %v315
  %329 = vrot.lane.b32.xlu0 %v326, 96
  %v330 = vpop.permute.xlu0 %329
  %v332 = vmul.f32 %v327, %v330
  %v333 = vmul.f32 %v315, %v257
  %v334 = vadd.f32 %v332, %v333
  %336 = vrot.lane.b32.xlu0 %v334, 96
  %v337 = vpop.permute.xlu0 %336
  %s339 = scalar_lea.vmem %s5, 16
  %340 = vst.msk [vmem:[%s339] sm:$0xff] %vm36, %v337
  %s341 = scalar_lea.vmem [#allocation2], 24
  %v342 = vld [vmem:[%s341] sm:$0xff]
  %v343 = vld [vmem:[%s2] sm:$0xff]
  %v344 = vld [vmem:[%s2 + $0x8] sm:$0xff]
  %v345 = vld [vmem:[%s2 + $0x10] sm:$0xff]
  %v346 = vld [vmem:[%s2 + $0x18] sm:$0xff]
  %v347 = vld [vmem:[%s4] sm:$0x1]
  %v349 = vperm.slane %v347, 0
  %v351 = vsel %vm36, %v337, 0
  %353 = vmatpush.msra.mxu0 0.0
  %354 = vmatpush.msra.mxu0 0.0
  %355 = vmatpush.msra.mxu0 0.0
  %356 = vmatpush.msra.mxu0 0.0
  %357 = vmatpush.msra.mxu0 0.0
  %358 = vmatpush.msra.mxu0 0.0
  %359 = vmatpush.msra.mxu0 0.0
  %360 = vmatpush.msra.mxu0 0.0
  %361 = vmatpush.msra.mxu0 0.0
  %362 = vmatpush.msra.mxu0 0.0
  %363 = vmatpush.msra.mxu0 0.0
  %364 = vmatpush.msra.mxu0 0.0
  %365 = vmatpush.msra.mxu0 %v346
  %366 = vmatpush.msra.mxu0 %v345
  %367 = vmatpush.msra.mxu0 %v344
  %368 = vmatpush.msra.mxu0 %v343
  %369 = vmatmul.f32.gmra.mxu0 %v351
  %v370 = vpop.f32.mrf.mxu0
  %v371 = vadd.f32 %v349, %v370
  %372 = vdwg.mxu0
  %v373 = vadd.f32 %v342, %v371
  %v374 = vxor.u32 %v373, 2147483648
  %v375 = vmul.f32 %v374, 1.442695
  %v376 = vpow.pop %v375
  %v377 = vadd.f32 %v376, 1.0
  %v378 = vrcp.pop %v377
  %v379 = vmul.f32 %v377, %v378
  %v380 = vsub.f32 1.0, %v379
  %v381 = vmul.f32 %v378, %v380
  %v382 = vadd.f32 %v378, %v381
  %vm383 = vweird.f32 %v377
  %vm384 = vweird.f32 %v378
  %vm385 = vmor %vm383, %vm384
  %v386 = vsel %vm385, %v378, %v382
  %v387 = vand.u32 2147483647, %v377
  %vm388 = vcmp.eq.f32.partialorder %v387, 8.507059e+37
  %v389 = vand.u32 %v377, 2147483648
  %v390 = vor.u32 1.1754944e-38, %v389
  %v391 = vsel %vm388, %v390, %v386
  %v392 = vmul.f32 1.0, %v391
  %394 = vrot.lane.b32.xlu0 %v371, 64
  %v395 = vpop.permute.xlu0 %394
  %v397 = vmul.f32 %v392, %v395
  %399 = vrot.lane.b32.xlu0 %v397, 64
  %v400 = vpop.permute.xlu0 %399
  %v402 = vadd.f32 %v342, %v400
  %v403 = vtanh.pop %v402
  %v404 = vsub.f32 1.0, %v392
  %406 = vrot.lane.b32.xlu0 %v403, 96
  %v407 = vpop.permute.xlu0 %406
  %v409 = vmul.f32 %v404, %v407
  %v410 = vmul.f32 %v392, %v334
  %v411 = vadd.f32 %v409, %v410
  %413 = vrot.lane.b32.xlu0 %v411, 96
  %v414 = vpop.permute.xlu0 %413
  %s416 = scalar_lea.vmem %s5, 24
  %417 = vst.msk [vmem:[%s416] sm:$0xff] %vm36, %v414
  %s418 = scalar_lea.vmem [#allocation2], 32
  %v419 = vld [vmem:[%s418] sm:$0xff]
  %v420 = vld [vmem:[%s2] sm:$0xff]
  %v421 = vld [vmem:[%s2 + $0x8] sm:$0xff]
  %v422 = vld [vmem:[%s2 + $0x10] sm:$0xff]
  %v423 = vld [vmem:[%s2 + $0x18] sm:$0xff]
  %v424 = vld [vmem:[%s4] sm:$0x1]
  %v426 = vperm.slane %v424, 0
  %v428 = vsel %vm36, %v414, 0
  %430 = vmatpush.msra.mxu0 0.0
  %431 = vmatpush.msra.mxu0 0.0
  %432 = vmatpush.msra.mxu0 0.0
  %433 = vmatpush.msra.mxu0 0.0
  %434 = vmatpush.msra.mxu0 0.0
  %435 = vmatpush.msra.mxu0 0.0
  %436 = vmatpush.msra.mxu0 0.0
  %437 = vmatpush.msra.mxu0 0.0
  %438 = vmatpush.msra.mxu0 0.0
  %439 = vmatpush.msra.mxu0 0.0
  %440 = vmatpush.msra.mxu0 0.0
  %441 = vmatpush.msra.mxu0 0.0
  %442 = vmatpush.msra.mxu0 %v423
  %443 = vmatpush.msra.mxu0 %v422
  %444 = vmatpush.msra.mxu0 %v421
  %445 = vmatpush.msra.mxu0 %v420
  %446 = vmatmul.f32.gmra.mxu0 %v428
  %v447 = vpop.f32.mrf.mxu0
  %v448 = vadd.f32 %v426, %v447
  %449 = vdwg.mxu0
  %v450 = vadd.f32 %v419, %v448
  %v451 = vxor.u32 %v450, 2147483648
  %v452 = vmul.f32 %v451, 1.442695
  %v453 = vpow.pop %v452
  %v454 = vadd.f32 %v453, 1.0
  %v455 = vrcp.pop %v454
  %v456 = vmul.f32 %v454, %v455
  %v457 = vsub.f32 1.0, %v456
  %v458 = vmul.f32 %v455, %v457
  %v459 = vadd.f32 %v455, %v458
  %vm460 = vweird.f32 %v454
  %vm461 = vweird.f32 %v455
  %vm462 = vmor %vm460, %vm461
  %v463 = vsel %vm462, %v455, %v459
  %v464 = vand.u32 2147483647, %v454
  %vm465 = vcmp.eq.f32.partialorder %v464, 8.507059e+37
  %v466 = vand.u32 %v454, 2147483648
  %v467 = vor.u32 1.1754944e-38, %v466
  %v468 = vsel %vm465, %v467, %v463
  %v469 = vmul.f32 1.0, %v468
  %471 = vrot.lane.b32.xlu0 %v448, 64
  %v472 = vpop.permute.xlu0 %471
  %v474 = vmul.f32 %v469, %v472
  %476 = vrot.lane.b32.xlu0 %v474, 64
  %v477 = vpop.permute.xlu0 %476
  %v479 = vadd.f32 %v419, %v477
  %v480 = vtanh.pop %v479
  %v481 = vsub.f32 1.0, %v469
  %483 = vrot.lane.b32.xlu0 %v480, 96
  %v484 = vpop.permute.xlu0 %483
  %v486 = vmul.f32 %v481, %v484
  %v487 = vmul.f32 %v469, %v411
  %v488 = vadd.f32 %v486, %v487
  %490 = vrot.lane.b32.xlu0 %v488, 96
  %v491 = vpop.permute.xlu0 %490
  %s493 = scalar_lea.vmem %s5, 32
  %494 = vst.msk [vmem:[%s493] sm:$0xff] %vm36, %v491
  %s495 = scalar_lea.vmem [#allocation2], 40
  %v496 = vld [vmem:[%s495] sm:$0xff]
  %v497 = vld [vmem:[%s2] sm:$0xff]
  %v498 = vld [vmem:[%s2 + $0x8] sm:$0xff]
  %v499 = vld [vmem:[%s2 + $0x10] sm:$0xff]
  %v500 = vld [vmem:[%s2 + $0x18] sm:$0xff]
  %v501 = vld [vmem:[%s4] sm:$0x1]
  %v503 = vperm.slane %v501, 0
  %v505 = vsel %vm36, %v491, 0
  %507 = vmatpush.msra.mxu0 0.0
  %508 = vmatpush.msra.mxu0 0.0
  %509 = vmatpush.msra.mxu0 0.0
  %510 = vmatpush.msra.mxu0 0.0
  %511 = vmatpush.msra.mxu0 0.0
  %512 = vmatpush.msra.mxu0 0.0
  %513 = vmatpush.msra.mxu0 0.0
  %514 = vmatpush.msra.mxu0 0.0
  %515 = vmatpush.msra.mxu0 0.0
  %516 = vmatpush.msra.mxu0 0.0
  %517 = vmatpush.msra.mxu0 0.0
  %518 = vmatpush.msra.mxu0 0.0
  %519 = vmatpush.msra.mxu0 %v500
  %520 = vmatpush.msra.mxu0 %v499
  %521 = vmatpush.msra.mxu0 %v498
  %522 = vmatpush.msra.mxu0 %v497
  %523 = vmatmul.f32.gmra.mxu0 %v505
  %v524 = vpop.f32.mrf.mxu0
  %v525 = vadd.f32 %v503, %v524
  %526 = vdwg.mxu0
  %v527 = vadd.f32 %v496, %v525
  %v528 = vxor.u32 %v527, 2147483648
  %v529 = vmul.f32 %v528, 1.442695
  %v530 = vpow.pop %v529
  %v531 = vadd.f32 %v530, 1.0
  %v532 = vrcp.pop %v531
  %v533 = vmul.f32 %v531, %v532
  %v534 = vsub.f32 1.0, %v533
  %v535 = vmul.f32 %v532, %v534
  %v536 = vadd.f32 %v532, %v535
  %vm537 = vweird.f32 %v531
  %vm538 = vweird.f32 %v532
  %vm539 = vmor %vm537, %vm538
  %v540 = vsel %vm539, %v532, %v536
  %v541 = vand.u32 2147483647, %v531
  %vm542 = vcmp.eq.f32.partialorder %v541, 8.507059e+37
  %v543 = vand.u32 %v531, 2147483648
  %v544 = vor.u32 1.1754944e-38, %v543
  %v545 = vsel %vm542, %v544, %v540
  %v546 = vmul.f32 1.0, %v545
  %548 = vrot.lane.b32.xlu0 %v525, 64
  %v549 = vpop.permute.xlu0 %548
  %v551 = vmul.f32 %v546, %v549
  %553 = vrot.lane.b32.xlu0 %v551, 64
  %v554 = vpop.permute.xlu0 %553
  %v556 = vadd.f32 %v496, %v554
  %v557 = vtanh.pop %v556
  %v558 = vsub.f32 1.0, %v546
  %560 = vrot.lane.b32.xlu0 %v557, 96
  %v561 = vpop.permute.xlu0 %560
  %v563 = vmul.f32 %v558, %v561
  %v564 = vmul.f32 %v546, %v488
  %v565 = vadd.f32 %v563, %v564
  %567 = vrot.lane.b32.xlu0 %v565, 96
  %v568 = vpop.permute.xlu0 %567
  %s570 = scalar_lea.vmem %s5, 40
  %571 = vst.msk [vmem:[%s570] sm:$0xff] %vm36, %v568
  %s572 = scalar_lea.vmem [#allocation2], 48
  %v573 = vld [vmem:[%s572] sm:$0xff]
  %v574 = vld [vmem:[%s2] sm:$0xff]
  %v575 = vld [vmem:[%s2 + $0x8] sm:$0xff]
  %v576 = vld [vmem:[%s2 + $0x10] sm:$0xff]
  %v577 = vld [vmem:[%s2 + $0x18] sm:$0xff]
  %v578 = vld [vmem:[%s4] sm:$0x1]
  %v580 = vperm.slane %v578, 0
  %v582 = vsel %vm36, %v568, 0
  %584 = vmatpush.msra.mxu0 0.0
  %585 = vmatpush.msra.mxu0 0.0
  %586 = vmatpush.msra.mxu0 0.0
  %587 = vmatpush.msra.mxu0 0.0
  %588 = vmatpush.msra.mxu0 0.0
  %589 = vmatpush.msra.mxu0 0.0
  %590 = vmatpush.msra.mxu0 0.0
  %591 = vmatpush.msra.mxu0 0.0
  %592 = vmatpush.msra.mxu0 0.0
  %593 = vmatpush.msra.mxu0 0.0
  %594 = vmatpush.msra.mxu0 0.0
  %595 = vmatpush.msra.mxu0 0.0
  %596 = vmatpush.msra.mxu0 %v577
  %597 = vmatpush.msra.mxu0 %v576
  %598 = vmatpush.msra.mxu0 %v575
  %599 = vmatpush.msra.mxu0 %v574
  %600 = vmatmul.f32.gmra.mxu0 %v582
  %v601 = vpop.f32.mrf.mxu0
  %v602 = vadd.f32 %v580, %v601
  %603 = vdwg.mxu0
  %v604 = vadd.f32 %v573, %v602
  %v605 = vxor.u32 %v604, 2147483648
  %v606 = vmul.f32 %v605, 1.442695
  %v607 = vpow.pop %v606
  %v608 = vadd.f32 %v607, 1.0
  %v609 = vrcp.pop %v608
  %v610 = vmul.f32 %v608, %v609
  %v611 = vsub.f32 1.0, %v610
  %v612 = vmul.f32 %v609, %v611
  %v613 = vadd.f32 %v609, %v612
  %vm614 = vweird.f32 %v608
  %vm615 = vweird.f32 %v609
  %vm616 = vmor %vm614, %vm615
  %v617 = vsel %vm616, %v609, %v613
  %v618 = vand.u32 2147483647, %v608
  %vm619 = vcmp.eq.f32.partialorder %v618, 8.507059e+37
  %v620 = vand.u32 %v608, 2147483648
  %v621 = vor.u32 1.1754944e-38, %v620
  %v622 = vsel %vm619, %v621, %v617
  %v623 = vmul.f32 1.0, %v622
  %625 = vrot.lane.b32.xlu0 %v602, 64
  %v626 = vpop.permute.xlu0 %625
  %v628 = vmul.f32 %v623, %v626
  %630 = vrot.lane.b32.xlu0 %v628, 64
  %v631 = vpop.permute.xlu0 %630
  %v633 = vadd.f32 %v573, %v631
  %v634 = vtanh.pop %v633
  %v635 = vsub.f32 1.0, %v623
  %637 = vrot.lane.b32.xlu0 %v634, 96
  %v638 = vpop.permute.xlu0 %637
  %v640 = vmul.f32 %v635, %v638
  %v641 = vmul.f32 %v623, %v565
  %v642 = vadd.f32 %v640, %v641
  %644 = vrot.lane.b32.xlu0 %v642, 96
  %v645 = vpop.permute.xlu0 %644
  %s647 = scalar_lea.vmem %s5, 48
  %648 = vst.msk [vmem:[%s647] sm:$0xff] %vm36, %v645
  %s649 = scalar_lea.vmem [#allocation2], 56
  %v650 = vld [vmem:[%s649] sm:$0xff]
  %v651 = vld [vmem:[%s2] sm:$0xff]
  %v652 = vld [vmem:[%s2 + $0x8] sm:$0xff]
  %v653 = vld [vmem:[%s2 + $0x10] sm:$0xff]
  %v654 = vld [vmem:[%s2 + $0x18] sm:$0xff]
  %v655 = vld [vmem:[%s4] sm:$0x1]
  %v657 = vperm.slane %v655, 0
  %v659 = vsel %vm36, %v645, 0
  %661 = vmatpush.msra.mxu0 0.0
  %662 = vmatpush.msra.mxu0 0.0
  %663 = vmatpush.msra.mxu0 0.0
  %664 = vmatpush.msra.mxu0 0.0
  %665 = vmatpush.msra.mxu0 0.0
  %666 = vmatpush.msra.mxu0 0.0
  %667 = vmatpush.msra.mxu0 0.0
  %668 = vmatpush.msra.mxu0 0.0
  %669 = vmatpush.msra.mxu0 0.0
  %670 = vmatpush.msra.mxu0 0.0
  %671 = vmatpush.msra.mxu0 0.0
  %672 = vmatpush.msra.mxu0 0.0
  %673 = vmatpush.msra.mxu0 %v654
  %674 = vmatpush.msra.mxu0 %v653
  %675 = vmatpush.msra.mxu0 %v652
  %676 = vmatpush.msra.mxu0 %v651
  %677 = vmatmul.f32.gmra.mxu0 %v659
  %v678 = vpop.f32.mrf.mxu0
  %v679 = vadd.f32 %v657, %v678
  %680 = vdwg.mxu0
  %v681 = vadd.f32 %v650, %v679
  %v682 = vxor.u32 %v681, 2147483648
  %v683 = vmul.f32 %v682, 1.442695
  %v684 = vpow.pop %v683
  %v685 = vadd.f32 %v684, 1.0
  %v686 = vrcp.pop %v685
  %v687 = vmul.f32 %v685, %v686
  %v688 = vsub.f32 1.0, %v687
  %v689 = vmul.f32 %v686, %v688
  %v690 = vadd.f32 %v686, %v689
  %vm691 = vweird.f32 %v685
  %vm692 = vweird.f32 %v686
  %vm693 = vmor %vm691, %vm692
  %v694 = vsel %vm693, %v686, %v690
  %v695 = vand.u32 2147483647, %v685
  %vm696 = vcmp.eq.f32.partialorder %v695, 8.507059e+37
  %v697 = vand.u32 %v685, 2147483648
  %v698 = vor.u32 1.1754944e-38, %v697
  %v699 = vsel %vm696, %v698, %v694
  %v700 = vmul.f32 1.0, %v699
  %702 = vrot.lane.b32.xlu0 %v679, 64
  %v703 = vpop.permute.xlu0 %702
  %v705 = vmul.f32 %v700, %v703
  %707 = vrot.lane.b32.xlu0 %v705, 64
  %v708 = vpop.permute.xlu0 %707
  %v710 = vadd.f32 %v650, %v708
  %v711 = vtanh.pop %v710
  %v712 = vsub.f32 1.0, %v700
  %714 = vrot.lane.b32.xlu0 %v711, 96
  %v715 = vpop.permute.xlu0 %714
  %v717 = vmul.f32 %v712, %v715
  %v718 = vmul.f32 %v700, %v642
  %v719 = vadd.f32 %v717, %v718
  %721 = vrot.lane.b32.xlu0 %v719, 96
  %v722 = vpop.permute.xlu0 %721
  %s724 = scalar_lea.vmem %s5, 56
  %725 = vst.msk [vmem:[%s724] sm:$0xff] %vm36, %v722
  // Predicated region
  $region22: #{_seq2seq_core.2} parent=0 // pred_check
    _
  $region23: #{_seq2seq_core.2} parent=0 // pred_check_branch
    %727 = sbr.rel (0) target = $region25
  $region24: #{_seq2seq_core.2} parent=0 // pred_region
    _
  $region25: #{_seq2seq_core.2} parent=0 // pred_fallthru
    _
  // Predicated region
  $region26: #{_seq2seq_core.2} parent=0 // pred_check
    _
  $region27: #{_seq2seq_core.2} parent=0 // pred_check_branch
    %729 = sbr.rel (0) target = $region29
  $region28: #{_seq2seq_core.2} parent=0 // pred_region
    _
  $region29: #{_seq2seq_core.2} parent=0 // pred_fallthru
    _

// kernel: _seq2seq_core.3
$region0: #{_seq2seq_core.3}
  #allocation0 [shape = 'u32[]', space=smem, size = 0x4, offset = 0x4, fixed_abs, tag = 'smem constant byte address 0x4 - core index']
  #allocation1 [shape = 'u32[72,128]{1,0:T(1,128)}', space=vmem, size = 0x9000, scoped, tag = 'internal scratch']
  #allocation2 [shape = 'f32[8,32]{1,0:T(8,128)}', space=vmem, size = 0x1000, scoped, tag = 'scratch operand']
  #allocation3 [shape = 's32[8,1]{1,0:T(8,128)}', space=vmem, size = 0x1000, scoped, tag = 'scratch operand']
  #allocation4 [shape = 's32[1]{0}', space=sflag, size = 0x4, scoped, tag = 'scoped memory for _seq2seq_core.3']
  #allocation5 [shape = 'u8[512]{0}', space=smem, size = 0x200, scoped, tag = 'prefetched SMEM operand 0']
  %s0 = inlined_call_operand.vmem [shape: s32[5], index: 0, kind: input, shape index: {}]
  %s1 = inlined_call_operand.vmem [shape: s32[6,8,1], index: 1, kind: input, shape index: {}]
  %s2 = inlined_call_operand.vmem [shape: f32[8,8,32], index: 2, kind: input, shape index: {}]
  %s3 = inlined_call_operand.vmem [shape: f32[8,32], index: 3, kind: input, shape index: {}]
  %s4 = inlined_call_operand.vmem [shape: f32[128,32], index: 4, kind: input, shape index: {}]
  %s5 = inlined_call_operand.vmem [shape: f32[64,96], index: 5, kind: input, shape index: {}]
  %s6 = inlined_call_operand.vmem [shape: f32[32,96], index: 6, kind: input, shape index: {}]
  %s7 = inlined_call_operand.vmem [shape: f32[1,96], index: 7, kind: input, shape index: {}]
  %s8 = inlined_call_operand.vmem [shape: f32[1,96], index: 8, kind: input, shape index: {}]
  %s9 = inlined_call_operand.vmem [shape: f32[64,128], index: 9, kind: input, shape index: {}]
  %s10 = inlined_call_operand.vmem [shape: f32[1,128], index: 10, kind: input, shape index: {}]
  %s11 = inlined_call_operand.hbm [shape: f32[5,8,128], index: 11, kind: output, shape index: {}]
  %s12 = sld [smem:[#allocation0]]
  $region77: #{_seq2seq_core.3} parent=0
    _
  %s14 = ssub.s32 1, %s12
  %s15 = scalar_select 0, %s14, %s12
  %s17 = sshll.u32 %s0, 4
  %s18 = int_to_ptr.vmem [resolvable:$true] %s17
  %20 = dma.vmem_to_smem %s18, 16, [#allocation5], [#allocation4]
  %22 = dma.done [#allocation4], 16
  %23 = sfence
  $region1: #{_seq2seq_core.3} parent=0
    #allocation6 [shape = 'u8[8192]{0}', space=vmem, size = 0x2000, scoped, tag = 'output window, operand 0']
    #allocation7 [shape = 's32[2]{0}', space=sflag, size = 0x8, scoped, tag = 'scoped memory for _seq2seq_core.3']
    %24 = vsyncpa [#allocation7], 0
    %s25 = scalar_lea.sflag [#allocation7], 1
    %26 = vsyncpa %s25, 0
    loop: start=0, step=1, limit=7
    $region2: #{_seq2seq_core.3} parent=1 // loop_pre_header
      _
    $region3: #{_seq2seq_core.3} parent=1 // loop_header
      %s28 = sphi 0, %s32
      %p29 = scmp.ge.s32.totalorder %s28, 7
      %s36 = sphi 0, %s36
      %s38 = sphi 0, %s36
      %s39 = sphi 0, %s38
      %s53 = sphi 0, %s39
      %s57 = sphi 0, %s57
      %s59 = sphi 0, %s57
      %s60 = sphi 0, %s59
      %s74 = sphi 0, %s60
      %s78 = sphi 0, %s78
      %s80 = sphi 0, %s78
      %s81 = sphi 0, %s80
      %s95 = sphi 0, %s81
      %s99 = sphi 0, %s99
      %s101 = sphi 0, %s99
      %s102 = sphi 0, %s101
      %s116 = sphi 0, %s102
      %s120 = sphi 0, %s120
      %s122 = sphi 0, %s120
      %s123 = sphi 0, %s122
      %s137 = sphi 0, %s123
      %s141 = sphi 0, %s141
      %s143 = sphi 0, %s141
      %s144 = sphi 0, %s143
      %s158 = sphi 0, %s144
      %s162 = sphi 0, %s162
      %s164 = sphi 0, %s162
      %s165 = sphi 0, %s164
      %s179 = sphi 0, %s165
      %s183 = sphi 0, %s183
      %s185 = sphi 0, %s183
      %s186 = sphi 0, %s185
      %s200 = sphi 0, %s186
      %s204 = sphi 0, %s204
      %s206 = sphi 0, %s204
      %s207 = sphi 0, %s206
      %s221 = sphi 0, %s207
      %s225 = sphi 0, %s225
      %s227 = sphi 0, %s225
      %s228 = sphi 0, %s227
      %s242 = sphi 0, %s228
      %s248 = sphi 0, %s250
      %s251 = sphi 0, %s248
      %s252 = sphi 0, %s251
      %s268 = sphi 0, %s252
    $region4: #{_seq2seq_core.3} parent=1 // loop_header_branch
      %31 = sbr.rel (%p29) target = $region8
    $region5: #{_seq2seq_core.3} parent=1 // loop_body
      %s33 = ssub.s32 %s28, 1
      %s34 = ssub.s32 %s28, 2
      %s35 = sadd.s32 %s28, 1
      %s37 = sadd.s32 %s36, 1
      %p40 = scmp.eq.s32.totalorder %s28, 4
      %p41 = scmp.ne.s32.totalorder %s36, %s38
      %p42 = scmp.eq.s32.totalorder %s28, 0
      %p43 = por %p41, %p42
      %p44 = scmp.ne.s32.totalorder %s36, %s38
      %p45 = scmp.eq.s32.totalorder %s33, 4
      %p46 = por %p44, %p45
      %p47 = scmp.ne.s32.totalorder %s38, %s39
      %p48 = scmp.eq.s32.totalorder %s33, 0
      %p49 = por %p47, %p48
      %p50 = scmp.ne.s32.totalorder %s38, %s39
      %p51 = scmp.eq.s32.totalorder %s34, 4
      %p52 = por %p50, %p51
      %p54 = scmp.ne.s32.totalorder %s39, %s53
      %p55 = scmp.eq.s32.totalorder %s34, 0
      %p56 = por %p54, %p55
      %s58 = sadd.s32 %s57, 1
      %p61 = scmp.eq.s32.totalorder %s28, 4
      %p62 = scmp.ne.s32.totalorder %s57, %s59
      %p63 = scmp.eq.s32.totalorder %s28, 0
      %p64 = por %p62, %p63
      %p65 = scmp.ne.s32.totalorder %s57, %s59
      %p66 = scmp.eq.s32.totalorder %s33, 4
      %p67 = por %p65, %p66
      %p68 = scmp.ne.s32.totalorder %s59, %s60
      %p69 = scmp.eq.s32.totalorder %s33, 0
      %p70 = por %p68, %p69
      %p71 = scmp.ne.s32.totalorder %s59, %s60
      %p72 = scmp.eq.s32.totalorder %s34, 4
      %p73 = por %p71, %p72
      %p75 = scmp.ne.s32.totalorder %s60, %s74
      %p76 = scmp.eq.s32.totalorder %s34, 0
      %p77 = por %p75, %p76
      %s79 = sadd.s32 %s78, 1
      %p82 = scmp.eq.s32.totalorder %s28, 4
      %p83 = scmp.ne.s32.totalorder %s78, %s80
      %p84 = scmp.eq.s32.totalorder %s28, 0
      %p85 = por %p83, %p84
      %p86 = scmp.ne.s32.totalorder %s78, %s80
      %p87 = scmp.eq.s32.totalorder %s33, 4
      %p88 = por %p86, %p87
      %p89 = scmp.ne.s32.totalorder %s80, %s81
      %p90 = scmp.eq.s32.totalorder %s33, 0
      %p91 = por %p89, %p90
      %p92 = scmp.ne.s32.totalorder %s80, %s81
      %p93 = scmp.eq.s32.totalorder %s34, 4
      %p94 = por %p92, %p93
      %p96 = scmp.ne.s32.totalorder %s81, %s95
      %p97 = scmp.eq.s32.totalorder %s34, 0
      %p98 = por %p96, %p97
      %s100 = sadd.s32 %s99, 1
      %p103 = scmp.eq.s32.totalorder %s28, 4
      %p104 = scmp.ne.s32.totalorder %s99, %s101
      %p105 = scmp.eq.s32.totalorder %s28, 0
      %p106 = por %p104, %p105
      %p107 = scmp.ne.s32.totalorder %s99, %s101
      %p108 = scmp.eq.s32.totalorder %s33, 4
      %p109 = por %p107, %p108
      %p110 = scmp.ne.s32.totalorder %s101, %s102
      %p111 = scmp.eq.s32.totalorder %s33, 0
      %p112 = por %p110, %p111
      %p113 = scmp.ne.s32.totalorder %s101, %s102
      %p114 = scmp.eq.s32.totalorder %s34, 4
      %p115 = por %p113, %p114
      %p117 = scmp.ne.s32.totalorder %s102, %s116
      %p118 = scmp.eq.s32.totalorder %s34, 0
      %p119 = por %p117, %p118
      %s121 = sadd.s32 %s120, 1
      %p124 = scmp.eq.s32.totalorder %s28, 4
      %p125 = scmp.ne.s32.totalorder %s120, %s122
      %p126 = scmp.eq.s32.totalorder %s28, 0
      %p127 = por %p125, %p126
      %p128 = scmp.ne.s32.totalorder %s120, %s122
      %p129 = scmp.eq.s32.totalorder %s33, 4
      %p130 = por %p128, %p129
      %p131 = scmp.ne.s32.totalorder %s122, %s123
      %p132 = scmp.eq.s32.totalorder %s33, 0
      %p133 = por %p131, %p132
      %p134 = scmp.ne.s32.totalorder %s122, %s123
      %p135 = scmp.eq.s32.totalorder %s34, 4
      %p136 = por %p134, %p135
      %p138 = scmp.ne.s32.totalorder %s123, %s137
      %p139 = scmp.eq.s32.totalorder %s34, 0
      %p140 = por %p138, %p139
      %s142 = sadd.s32 %s141, 1
      %p145 = scmp.eq.s32.totalorder %s28, 4
      %p146 = scmp.ne.s32.totalorder %s141, %s143
      %p147 = scmp.eq.s32.totalorder %s28, 0
      %p148 = por %p146, %p147
      %p149 = scmp.ne.s32.totalorder %s141, %s143
      %p150 = scmp.eq.s32.totalorder %s33, 4
      %p151 = por %p149, %p150
      %p152 = scmp.ne.s32.totalorder %s143, %s144
      %p153 = scmp.eq.s32.totalorder %s33, 0
      %p154 = por %p152, %p153
      %p155 = scmp.ne.s32.totalorder %s143, %s144
      %p156 = scmp.eq.s32.totalorder %s34, 4
      %p157 = por %p155, %p156
      %p159 = scmp.ne.s32.totalorder %s144, %s158
      %p160 = scmp.eq.s32.totalorder %s34, 0
      %p161 = por %p159, %p160
      %s163 = sadd.s32 %s162, 1
      %p166 = scmp.eq.s32.totalorder %s28, 4
      %p167 = scmp.ne.s32.totalorder %s162, %s164
      %p168 = scmp.eq.s32.totalorder %s28, 0
      %p169 = por %p167, %p168
      %p170 = scmp.ne.s32.totalorder %s162, %s164
      %p171 = scmp.eq.s32.totalorder %s33, 4
      %p172 = por %p170, %p171
      %p173 = scmp.ne.s32.totalorder %s164, %s165
      %p174 = scmp.eq.s32.totalorder %s33, 0
      %p175 = por %p173, %p174
      %p176 = scmp.ne.s32.totalorder %s164, %s165
      %p177 = scmp.eq.s32.totalorder %s34, 4
      %p178 = por %p176, %p177
      %p180 = scmp.ne.s32.totalorder %s165, %s179
      %p181 = scmp.eq.s32.totalorder %s34, 0
      %p182 = por %p180, %p181
      %s184 = sadd.s32 %s183, 1
      %p187 = scmp.eq.s32.totalorder %s28, 4
      %p188 = scmp.ne.s32.totalorder %s183, %s185
      %p189 = scmp.eq.s32.totalorder %s28, 0
      %p190 = por %p188, %p189
      %p191 = scmp.ne.s32.totalorder %s183, %s185
      %p192 = scmp.eq.s32.totalorder %s33, 4
      %p193 = por %p191, %p192
      %p194 = scmp.ne.s32.totalorder %s185, %s186
      %p195 = scmp.eq.s32.totalorder %s33, 0
      %p196 = por %p194, %p195
      %p197 = scmp.ne.s32.totalorder %s185, %s186
      %p198 = scmp.eq.s32.totalorder %s34, 4
      %p199 = por %p197, %p198
      %p201 = scmp.ne.s32.totalorder %s186, %s200
      %p202 = scmp.eq.s32.totalorder %s34, 0
      %p203 = por %p201, %p202
      %s205 = sadd.s32 %s204, 1
      %p208 = scmp.eq.s32.totalorder %s28, 4
      %p209 = scmp.ne.s32.totalorder %s204, %s206
      %p210 = scmp.eq.s32.totalorder %s28, 0
      %p211 = por %p209, %p210
      %p212 = scmp.ne.s32.totalorder %s204, %s206
      %p213 = scmp.eq.s32.totalorder %s33, 4
      %p214 = por %p212, %p213
      %p215 = scmp.ne.s32.totalorder %s206, %s207
      %p216 = scmp.eq.s32.totalorder %s33, 0
      %p217 = por %p215, %p216
      %p218 = scmp.ne.s32.totalorder %s206, %s207
      %p219 = scmp.eq.s32.totalorder %s34, 4
      %p220 = por %p218, %p219
      %p222 = scmp.ne.s32.totalorder %s207, %s221
      %p223 = scmp.eq.s32.totalorder %s34, 0
      %p224 = por %p222, %p223
      %s226 = sadd.s32 %s225, 1
      %p229 = scmp.eq.s32.totalorder %s28, 4
      %p230 = scmp.ne.s32.totalorder %s225, %s227
      %p231 = scmp.eq.s32.totalorder %s28, 0
      %p232 = por %p230, %p231
      %p233 = scmp.ne.s32.totalorder %s225, %s227
      %p234 = scmp.eq.s32.totalorder %s33, 4
      %p235 = por %p233, %p234
      %p236 = scmp.ne.s32.totalorder %s227, %s228
      %p237 = scmp.eq.s32.totalorder %s33, 0
      %p238 = por %p236, %p237
      %p239 = scmp.ne.s32.totalorder %s227, %s228
      %p240 = scmp.eq.s32.totalorder %s34, 4
      %p241 = por %p239, %p240
      %p243 = scmp.ne.s32.totalorder %s228, %s242
      %p244 = scmp.eq.s32.totalorder %s34, 0
      %p245 = por %p243, %p244
      %s246 = ssub.s32 %s28, %s35
      %p247 = scmp.eq.s32.totalorder %s246, 0
      %s249 = sadd.s32 %s248, 1
      %s250 = scalar_select %p247, %s248, %s249
      %p253 = pneg %p247
      %p254 = scmp.eq.s32.totalorder %s28, 4
      %p255 = por %p253, %p254
      %p256 = scmp.ne.s32.totalorder %s248, %s251
      %p257 = scmp.eq.s32.totalorder %s28, 0
      %p258 = por %p256, %p257
      %p259 = scmp.ne.s32.totalorder %s248, %s251
      %p260 = scmp.eq.s32.totalorder %s33, 4
      %p261 = por %p259, %p260
      %p262 = scmp.ne.s32.totalorder %s251, %s252
      %p263 = scmp.eq.s32.totalorder %s33, 0
      %p264 = por %p262, %p263
      %p265 = scmp.ne.s32.totalorder %s251, %s252
      %p266 = scmp.eq.s32.totalorder %s34, 4
      %p267 = por %p265, %p266
      %p269 = scmp.ne.s32.totalorder %s252, %s268
      %p270 = scmp.eq.s32.totalorder %s34, 0
      %p271 = por %p269, %p270
      %p272 = scmp.le.s32.totalorder 1, %s28
      %p273 = scmp.lt.s32.totalorder %s28, 6
      %p274 = pnand %p272, %p273
      %p275 = pneg %p274
      // Predicated region
      $region9: #{_seq2seq_core.3} parent=5 // pred_check
        _
      $region10: #{_seq2seq_core.3} parent=5 // pred_check_branch
        %277 = sbr.rel (%p274) target = $region12
      $region11: #{_seq2seq_core.3} parent=5 // pred_region
        %s278 = ssub.s32 %s28, 1
        // Predicated region
        $region13: #{_seq2seq_core.3} parent=11 // pred_check
          %p279 = pneg %p49
        $region14: #{_seq2seq_core.3} parent=11 // pred_check_branch
          %281 = sbr.rel (%p279) target = $region16
        $region15: #{_seq2seq_core.3} parent=11 // pred_region
          _
        $region16: #{_seq2seq_core.3} parent=11 // pred_fallthru
          _
        // Predicated region
        $region17: #{_seq2seq_core.3} parent=11 // pred_check
          %p282 = pneg %p70
        $region18: #{_seq2seq_core.3} parent=11 // pred_check_branch
          %284 = sbr.rel (%p282) target = $region20
        $region19: #{_seq2seq_core.3} parent=11 // pred_region
          _
        $region20: #{_seq2seq_core.3} parent=11 // pred_fallthru
          _
        // Predicated region
        $region21: #{_seq2seq_core.3} parent=11 // pred_check
          %p285 = pneg %p91
        $region22: #{_seq2seq_core.3} parent=11 // pred_check_branch
          %287 = sbr.rel (%p285) target = $region24
        $region23: #{_seq2seq_core.3} parent=11 // pred_region
          _
        $region24: #{_seq2seq_core.3} parent=11 // pred_fallthru
          _
        // Predicated region
        $region25: #{_seq2seq_core.3} parent=11 // pred_check
          %p288 = pneg %p112
        $region26: #{_seq2seq_core.3} parent=11 // pred_check_branch
          %290 = sbr.rel (%p288) target = $region28
        $region27: #{_seq2seq_core.3} parent=11 // pred_region
          _
        $region28: #{_seq2seq_core.3} parent=11 // pred_fallthru
          _
        // Predicated region
        $region29: #{_seq2seq_core.3} parent=11 // pred_check
          %p291 = pneg %p133
        $region30: #{_seq2seq_core.3} parent=11 // pred_check_branch
          %293 = sbr.rel (%p291) target = $region32
        $region31: #{_seq2seq_core.3} parent=11 // pred_region
          _
        $region32: #{_seq2seq_core.3} parent=11 // pred_fallthru
          _
        // Predicated region
        $region33: #{_seq2seq_core.3} parent=11 // pred_check
          %p294 = pneg %p154
        $region34: #{_seq2seq_core.3} parent=11 // pred_check_branch
          %296 = sbr.rel (%p294) target = $region36
        $region35: #{_seq2seq_core.3} parent=11 // pred_region
          _
        $region36: #{_seq2seq_core.3} parent=11 // pred_fallthru
          _
        // Predicated region
        $region37: #{_seq2seq_core.3} parent=11 // pred_check
          %p297 = pneg %p175
        $region38: #{_seq2seq_core.3} parent=11 // pred_check_branch
          %299 = sbr.rel (%p297) target = $region40
        $region39: #{_seq2seq_core.3} parent=11 // pred_region
          _
        $region40: #{_seq2seq_core.3} parent=11 // pred_fallthru
          _
        // Predicated region
        $region41: #{_seq2seq_core.3} parent=11 // pred_check
          %p300 = pneg %p196
        $region42: #{_seq2seq_core.3} parent=11 // pred_check_branch
          %302 = sbr.rel (%p300) target = $region44
        $region43: #{_seq2seq_core.3} parent=11 // pred_region
          _
        $region44: #{_seq2seq_core.3} parent=11 // pred_fallthru
          _
        // Predicated region
        $region45: #{_seq2seq_core.3} parent=11 // pred_check
          %p303 = pneg %p217
        $region46: #{_seq2seq_core.3} parent=11 // pred_check_branch
          %305 = sbr.rel (%p303) target = $region48
        $region47: #{_seq2seq_core.3} parent=11 // pred_region
          _
        $region48: #{_seq2seq_core.3} parent=11 // pred_fallthru
          _
        // Predicated region
        $region49: #{_seq2seq_core.3} parent=11 // pred_check
          %p306 = pneg %p238
        $region50: #{_seq2seq_core.3} parent=11 // pred_check_branch
          %308 = sbr.rel (%p306) target = $region52
        $region51: #{_seq2seq_core.3} parent=11 // pred_region
          _
        $region52: #{_seq2seq_core.3} parent=11 // pred_fallthru
          _
      $region12: #{_seq2seq_core.3} parent=5 // pred_fallthru
        _
      %p309 = scmp.lt.s32.totalorder %s28, 5
      // Predicated region
      $region53: #{_seq2seq_core.3} parent=5 // pred_check
        %p310 = pneg %p309
      $region54: #{_seq2seq_core.3} parent=5 // pred_check_branch
        %312 = sbr.rel (%p310) target = $region56
      $region55: #{_seq2seq_core.3} parent=5 // pred_region
        _
      $region56: #{_seq2seq_core.3} parent=5 // pred_fallthru
        _
      %p313 = scmp.le.s32.totalorder 1, %s28
      %p314 = scmp.lt.s32.totalorder %s28, 6
      %p315 = pnand %p313, %p314
      %p316 = pneg %p315
      // Predicated region
      $region57: #{_seq2seq_core.3} parent=5 // pred_check
        _
      $region58: #{_seq2seq_core.3} parent=5 // pred_check_branch
        %318 = sbr.rel (%p315) target = $region60
      $region59: #{_seq2seq_core.3} parent=5 // pred_region
        %s319 = ssub.s32 %s28, 1
        %p320 = pneg %p49
        %p321 = pneg %p46
        %p322 = pneg %p70
        %p323 = pneg %p67
        %p324 = pneg %p91
        %p325 = pneg %p88
        %p326 = pneg %p112
        %p327 = pneg %p109
        %p328 = pneg %p133
        %p329 = pneg %p130
        %p330 = pneg %p154
        %p331 = pneg %p151
        %p332 = pneg %p175
        %p333 = pneg %p172
        %p334 = pneg %p196
        %p335 = pneg %p193
        %p336 = pneg %p217
        %p337 = pneg %p214
        %p338 = pneg %p238
        %p339 = pneg %p235
        %p340 = pneg %p264
        %p341 = pneg %p261
        %s342 = sand.u32 %s251, 1
        %s343 = scalar_lea.sflag [#allocation7], %s342
        %s344 = sand.u32 %s251, 1
        %s345 = smul.addr %s344, 8
        %s346 = scalar_lea.vmem [#allocation6], %s345
        %p347 = scmp.eq.s32.totalorder %s33, 0
        // Predicated region
        $region61: #{_seq2seq_core.3} parent=59 // pred_check
          %p348 = pneg %p347
        $region62: #{_seq2seq_core.3} parent=59 // pred_check_branch
          %350 = sbr.rel (%p348) target = $region64
        $region63: #{_seq2seq_core.3} parent=59 // pred_region
          %v351 = vld [vmem:[%s3] sm:$0xff]
          %vm352 = vcmask 261120
          %353 = vst.msk [vmem:[#allocation2] sm:$0xff] %vm352, %v351
          %vm354 = vcmask 7168
          %355 = vst.msk [vmem:[#allocation3] sm:$0xff] %vm354, 0
        $region64: #{_seq2seq_core.3} parent=59 // pred_fallthru
          _
        %s356 = sld [smem:[#allocation5 + %s33]]
        %p357 = scmp.eq.s32.totalorder %s356, 1
        %v358 = vld [vmem:[#allocation3] sm:$0xff]
        %s359 = smul.u32 %s33, 8
        %s360 = scalar_lea.vmem %s1, %s359
        %v361 = vld [vmem:[%s360] sm:$0xff]
        %s362 = scalar_select %p357, 1, 0
        %v363 = vstv %s362
        %vm364 = vcmp.eq.s32.totalorder %v363, 1
        %v365 = vsel %vm364, %v358, %v361
        %v366 = vlaneseq
        %v367 = vand.u32 %v366, 127
        %368 = vset.pattern.permute.xlu0 0
        %369 = vperm.xlu0 %368, %v365
        %v370 = vpop.permute.xlu0 %369
        %vm371 = vcmp.eq.s32.totalorder %v370, %v367
        %v372 = vsel %vm371, 1, 0
        %v373 = vcvt.s32.f32 %v372
        %v374 = vld [vmem:[%s4] sm:$0xff]
        %v375 = vld [vmem:[%s4 + $0x8] sm:$0xff]
        %v376 = vld [vmem:[%s4 + $0x10] sm:$0xff]
        %v377 = vld [vmem:[%s4 + $0x18] sm:$0xff]
        %v378 = vld [vmem:[%s4 + $0x20] sm:$0xff]
        %v379 = vld [vmem:[%s4 + $0x28] sm:$0xff]
        %v380 = vld [vmem:[%s4 + $0x30] sm:$0xff]
        %v381 = vld [vmem:[%s4 + $0x38] sm:$0xff]
        %v382 = vld [vmem:[%s4 + $0x40] sm:$0xff]
        %v383 = vld [vmem:[%s4 + $0x48] sm:$0xff]
        %v384 = vld [vmem:[%s4 + $0x50] sm:$0xff]
        %v385 = vld [vmem:[%s4 + $0x58] sm:$0xff]
        %v386 = vld [vmem:[%s4 + $0x60] sm:$0xff]
        %v387 = vld [vmem:[%s4 + $0x68] sm:$0xff]
        %v388 = vld [vmem:[%s4 + $0x70] sm:$0xff]
        %v389 = vld [vmem:[%s4 + $0x78] sm:$0xff]
        %390 = vmatpush.msra.mxu0 %v389
        %391 = vmatpush.msra.mxu0 %v388
        %392 = vmatpush.msra.mxu0 %v387
        %393 = vmatpush.msra.mxu0 %v386
        %394 = vmatpush.msra.mxu0 %v385
        %395 = vmatpush.msra.mxu0 %v384
        %396 = vmatpush.msra.mxu0 %v383
        %397 = vmatpush.msra.mxu0 %v382
        %398 = vmatpush.msra.mxu0 %v381
        %399 = vmatpush.msra.mxu0 %v380
        %400 = vmatpush.msra.mxu0 %v379
        %401 = vmatpush.msra.mxu0 %v378
        %402 = vmatpush.msra.mxu0 %v377
        %403 = vmatpush.msra.mxu0 %v376
        %404 = vmatpush.msra.mxu0 %v375
        %405 = vmatpush.msra.mxu0 %v374
        %406 = vmatmul.f32.gmra.mxu0 %v373
        %v407 = vpop.f32.mrf.mxu0
        %v408 = vadd.f32 0.0, %v407
        %409 = vdwg.mxu0
        %v410 = vld [vmem:[#allocation2] sm:$0xff]
        %v411 = vld [vmem:[%s2] sm:$0xff]
        %v412 = vld [vmem:[%s2 + $0x8] sm:$0xff]
        %v413 = vld [vmem:[%s2 + $0x10] sm:$0xff]
        %v414 = vld [vmem:[%s2 + $0x18] sm:$0xff]
        %v415 = vld [vmem:[%s2 + $0x20] sm:$0xff]
        %v416 = vld [vmem:[%s2 + $0x28] sm:$0xff]
        %v417 = vld [vmem:[%s2 + $0x30] sm:$0xff]
        %v418 = vld [vmem:[%s2 + $0x38] sm:$0xff]
        %v420 = vrot.slane %v410, 1
        %v421 = vrot.slane %v410, 2
        %v422 = vrot.slane %v410, 3
        %v423 = vrot.slane %v410, 4
        %v424 = vrot.slane %v410, 5
        %v425 = vrot.slane %v410, 6
        %v426 = vrot.slane %v410, 7
        %vm427 = vcmask 261120
        %v428 = vsel %vm427, %v410, 0
        %v431 = vsel %vm427, %v411, 0
        %433 = vmatpush.xpose.msra.mxu0 0.0
        %434 = vmatpush.xpose.msra.mxu0 0.0
        %435 = vmatpush.xpose.msra.mxu0 0.0
        %436 = vmatpush.xpose.msra.mxu0 0.0
        %437 = vmatpush.xpose.msra.mxu0 0.0
        %438 = vmatpush.xpose.msra.mxu0 0.0
        %439 = vmatpush.xpose.msra.mxu0 0.0
        %440 = vmatpush.xpose.msra.mxu0 0.0
        %441 = vmatpush.xpose.msra.mxu0 0.0
        %442 = vmatpush.xpose.msra.mxu0 0.0
        %443 = vmatpush.xpose.msra.mxu0 0.0
        %444 = vmatpush.xpose.msra.mxu0 0.0
        %445 = vmatpush.xpose.msra.mxu0 0.0
        %446 = vmatpush.xpose.msra.mxu0 0.0
        %447 = vmatpush.xpose.msra.mxu0 0.0
        %448 = vmatpush.xpose.msra.mxu0 %v431
        %449 = vmatmul.f32.gmra.mxu0 %v428
        %v450 = vpop.f32.mrf.mxu0
        %v451 = vadd.f32 0.0, %v450
        %452 = vdwg.mxu0
        %v453 = vsel %vm427, %v420, 0
        %v456 = vsel %vm427, %v412, 0
        %458 = vmatpush.xpose.msra.mxu0 0.0
        %459 = vmatpush.xpose.msra.mxu0 0.0
        %460 = vmatpush.xpose.msra.mxu0 0.0
        %461 = vmatpush.xpose.msra.mxu0 0.0
        %462 = vmatpush.xpose.msra.mxu0 0.0
        %463 = vmatpush.xpose.msra.mxu0 0.0
        %464 = vmatpush.xpose.msra.mxu0 0.0
        %465 = vmatpush.xpose.msra.mxu0 0.0
        %466 = vmatpush.xpose.msra.mxu0 0.0
        %467 = vmatpush.xpose.msra.mxu0 0.0
        %468 = vmatpush.xpose.msra.mxu0 0.0
        %469 = vmatpush.xpose.msra.mxu0 0.0
        %470 = vmatpush.xpose.msra.mxu0 0.0
        %471 = vmatpush.xpose.msra.mxu0 0.0
        %472 = vmatpush.xpose.msra.mxu0 0.0
        %473 = vmatpush.xpose.msra.mxu0 %v456
        %474 = vmatmul.f32.gmra.mxu0 %v453
        %v475 = vpop.f32.mrf.mxu0
        %v476 = vadd.f32 0.0, %v475
        %477 = vdwg.mxu0
        %v478 = vsel %vm427, %v421, 0
        %v481 = vsel %vm427, %v413, 0
        %483 = vmatpush.xpose.msra.mxu0 0.0
        %484 = vmatpush.xpose.msra.mxu0 0.0
        %485 = vmatpush.xpose.msra.mxu0 0.0
        %486 = vmatpush.xpose.msra.mxu0 0.0
        %487 = vmatpush.xpose.msra.mxu0 0.0
        %488 = vmatpush.xpose.msra.mxu0 0.0
        %489 = vmatpush.xpose.msra.mxu0 0.0
        %490 = vmatpush.xpose.msra.mxu0 0.0
        %491 = vmatpush.xpose.msra.mxu0 0.0
        %492 = vmatpush.xpose.msra.mxu0 0.0
        %493 = vmatpush.xpose.msra.mxu0 0.0
        %494 = vmatpush.xpose.msra.mxu0 0.0
        %495 = vmatpush.xpose.msra.mxu0 0.0
        %496 = vmatpush.xpose.msra.mxu0 0.0
        %497 = vmatpush.xpose.msra.mxu0 0.0
        %498 = vmatpush.xpose.msra.mxu0 %v481
        %499 = vmatmul.f32.gmra.mxu0 %v478
        %v500 = vpop.f32.mrf.mxu0
        %v501 = vadd.f32 0.0, %v500
        %502 = vdwg.mxu0
        %v503 = vsel %vm427, %v422, 0
        %v506 = vsel %vm427, %v414, 0
        %508 = vmatpush.xpose.msra.mxu0 0.0
        %509 = vmatpush.xpose.msra.mxu0 0.0
        %510 = vmatpush.xpose.msra.mxu0 0.0
        %511 = vmatpush.xpose.msra.mxu0 0.0
        %512 = vmatpush.xpose.msra.mxu0 0.0
        %513 = vmatpush.xpose.msra.mxu0 0.0
        %514 = vmatpush.xpose.msra.mxu0 0.0
        %515 = vmatpush.xpose.msra.mxu0 0.0
        %516 = vmatpush.xpose.msra.mxu0 0.0
        %517 = vmatpush.xpose.msra.mxu0 0.0
        %518 = vmatpush.xpose.msra.mxu0 0.0
        %519 = vmatpush.xpose.msra.mxu0 0.0
        %520 = vmatpush.xpose.msra.mxu0 0.0
        %521 = vmatpush.xpose.msra.mxu0 0.0
        %522 = vmatpush.xpose.msra.mxu0 0.0
        %523 = vmatpush.xpose.msra.mxu0 %v506
        %524 = vmatmul.f32.gmra.mxu0 %v503
        %v525 = vpop.f32.mrf.mxu0
        %v526 = vadd.f32 0.0, %v525
        %527 = vdwg.mxu0
        %v528 = vsel %vm427, %v423, 0
        %v531 = vsel %vm427, %v415, 0
        %533 = vmatpush.xpose.msra.mxu0 0.0
        %534 = vmatpush.xpose.msra.mxu0 0.0
        %535 = vmatpush.xpose.msra.mxu0 0.0
        %536 = vmatpush.xpose.msra.mxu0 0.0
        %537 = vmatpush.xpose.msra.mxu0 0.0
        %538 = vmatpush.xpose.msra.mxu0 0.0
        %539 = vmatpush.xpose.msra.mxu0 0.0
        %540 = vmatpush.xpose.msra.mxu0 0.0
        %541 = vmatpush.xpose.msra.mxu0 0.0
        %542 = vmatpush.xpose.msra.mxu0 0.0
        %543 = vmatpush.xpose.msra.mxu0 0.0
        %544 = vmatpush.xpose.msra.mxu0 0.0
        %545 = vmatpush.xpose.msra.mxu0 0.0
        %546 = vmatpush.xpose.msra.mxu0 0.0
        %547 = vmatpush.xpose.msra.mxu0 0.0
        %548 = vmatpush.xpose.msra.mxu0 %v531
        %549 = vmatmul.f32.gmra.mxu0 %v528
        %v550 = vpop.f32.mrf.mxu0
        %v551 = vadd.f32 0.0, %v550
        %552 = vdwg.mxu0
        %v553 = vsel %vm427, %v424, 0
        %v556 = vsel %vm427, %v416, 0
        %558 = vmatpush.xpose.msra.mxu0 0.0
        %559 = vmatpush.xpose.msra.mxu0 0.0
        %560 = vmatpush.xpose.msra.mxu0 0.0
        %561 = vmatpush.xpose.msra.mxu0 0.0
        %562 = vmatpush.xpose.msra.mxu0 0.0
        %563 = vmatpush.xpose.msra.mxu0 0.0
        %564 = vmatpush.xpose.msra.mxu0 0.0
        %565 = vmatpush.xpose.msra.mxu0 0.0
        %566 = vmatpush.xpose.msra.mxu0 0.0
        %567 = vmatpush.xpose.msra.mxu0 0.0
        %568 = vmatpush.xpose.msra.mxu0 0.0
        %569 = vmatpush.xpose.msra.mxu0 0.0
        %570 = vmatpush.xpose.msra.mxu0 0.0
        %571 = vmatpush.xpose.msra.mxu0 0.0
        %572 = vmatpush.xpose.msra.mxu0 0.0
        %573 = vmatpush.xpose.msra.mxu0 %v556
        %574 = vmatmul.f32.gmra.mxu0 %v553
        %v575 = vpop.f32.mrf.mxu0
        %v576 = vadd.f32 0.0, %v575
        %577 = vdwg.mxu0
        %v578 = vsel %vm427, %v425, 0
        %v581 = vsel %vm427, %v417, 0
        %583 = vmatpush.xpose.msra.mxu0 0.0
        %584 = vmatpush.xpose.msra.mxu0 0.0
        %585 = vmatpush.xpose.msra.mxu0 0.0
        %586 = vmatpush.xpose.msra.mxu0 0.0
        %587 = vmatpush.xpose.msra.mxu0 0.0
        %588 = vmatpush.xpose.msra.mxu0 0.0
        %589 = vmatpush.xpose.msra.mxu0 0.0
        %590 = vmatpush.xpose.msra.mxu0 0.0
        %591 = vmatpush.xpose.msra.mxu0 0.0
        %592 = vmatpush.xpose.msra.mxu0 0.0
        %593 = vmatpush.xpose.msra.mxu0 0.0
        %594 = vmatpush.xpose.msra.mxu0 0.0
        %595 = vmatpush.xpose.msra.mxu0 0.0
        %596 = vmatpush.xpose.msra.mxu0 0.0
        %597 = vmatpush.xpose.msra.mxu0 0.0
        %598 = vmatpush.xpose.msra.mxu0 %v581
        %599 = vmatmul.f32.gmra.mxu0 %v578
        %v600 = vpop.f32.mrf.mxu0
        %v601 = vadd.f32 0.0, %v600
        %602 = vdwg.mxu0
        %v603 = vsel %vm427, %v426, 0
        %v606 = vsel %vm427, %v418, 0
        %608 = vmatpush.xpose.msra.mxu0 0.0
        %609 = vmatpush.xpose.msra.mxu0 0.0
        %610 = vmatpush.xpose.msra.mxu0 0.0
        %611 = vmatpush.xpose.msra.mxu0 0.0
        %612 = vmatpush.xpose.msra.mxu0 0.0
        %613 = vmatpush.xpose.msra.mxu0 0.0
        %614 = vmatpush.xpose.msra.mxu0 0.0
        %615 = vmatpush.xpose.msra.mxu0 0.0
        %616 = vmatpush.xpose.msra.mxu0 0.0
        %617 = vmatpush.xpose.msra.mxu0 0.0
        %618 = vmatpush.xpose.msra.mxu0 0.0
        %619 = vmatpush.xpose.msra.mxu0 0.0
        %620 = vmatpush.xpose.msra.mxu0 0.0
        %621 = vmatpush.xpose.msra.mxu0 0.0
        %622 = vmatpush.xpose.msra.mxu0 0.0
        %623 = vmatpush.xpose.msra.mxu0 %v606
        %624 = vmatmul.f32.gmra.mxu0 %v603
        %v625 = vpop.f32.mrf.mxu0
        %v626 = vadd.f32 0.0, %v625
        %627 = vdwg.mxu0
        %vm628 = vcmask 57344
        %v629 = vsel %vm628, %v451, -inf
        %630 = vmax.xlane.f32.xlu0 %v629
        %v631 = vpop.xlane.xlu0 %630
        %v632 = vsel %vm628, %v476, -inf
        %633 = vmax.xlane.f32.xlu0 %v632
        %v634 = vpop.xlane.xlu0 %633
        %v635 = vsel %vm628, %v501, -inf
        %636 = vmax.xlane.f32.xlu0 %v635
        %v637 = vpop.xlane.xlu0 %636
        %v638 = vsel %vm628, %v526, -inf
        %639 = vmax.xlane.f32.xlu0 %v638
        %v640 = vpop.xlane.xlu0 %639
        %v641 = vsel %vm628, %v551, -inf
        %642 = vmax.xlane.f32.xlu0 %v641
        %v643 = vpop.xlane.xlu0 %642
        %v644 = vsel %vm628, %v576, -inf
        %645 = vmax.xlane.f32.xlu0 %v644
        %v646 = vpop.xlane.xlu0 %645
        %v647 = vsel %vm628, %v601, -inf
        %648 = vmax.xlane.f32.xlu0 %v647
        %v649 = vpop.xlane.xlu0 %648
        %v650 = vsel %vm628, %v626, -inf
        %651 = vmax.xlane.f32.xlu0 %v650
        %v652 = vpop.xlane.xlu0 %651
        %v653 = vsub.f32 %v451, %v631
        %v654 = vsub.f32 %v476, %v634
        %v655 = vsub.f32 %v501, %v637
        %v656 = vsub.f32 %v526, %v640
        %v657 = vsub.f32 %v551, %v643
        %v658 = vsub.f32 %v576, %v646
        %v659 = vsub.f32 %v601, %v649
        %v660 = vsub.f32 %v626, %v652
        %v661 = vmul.f32 %v653, 1.442695
        %v662 = vpow.pop %v661
        %v663 = vmul.f32 %v654, 1.442695
        %v664 = vpow.pop %v663
        %v665 = vmul.f32 %v655, 1.442695
        %v666 = vpow.pop %v665
        %v667 = vmul.f32 %v656, 1.442695
        %v668 = vpow.pop %v667
        %v669 = vmul.f32 %v657, 1.442695
        %v670 = vpow.pop %v669
        %v671 = vmul.f32 %v658, 1.442695
        %v672 = vpow.pop %v671
        %v673 = vmul.f32 %v659, 1.442695
        %v674 = vpow.pop %v673
        %v675 = vmul.f32 %v660, 1.442695
        %v676 = vpow.pop %v675
        %v677 = vsel %vm628, %v662, 0.0
        %678 = vadd.xlane.f32.xlu0 %v677
        %v679 = vpop.xlane.xlu0 %678
        %v680 = vsel %vm628, %v664, 0.0
        %681 = vadd.xlane.f32.xlu0 %v680
        %v682 = vpop.xlane.xlu0 %681
        %v683 = vsel %vm628, %v666, 0.0
        %684 = vadd.xlane.f32.xlu0 %v683
        %v685 = vpop.xlane.xlu0 %684
        %v686 = vsel %vm628, %v668, 0.0
        %687 = vadd.xlane.f32.xlu0 %v686
        %v688 = vpop.xlane.xlu0 %687
        %v689 = vsel %vm628, %v670, 0.0
        %690 = vadd.xlane.f32.xlu0 %v689
        %v691 = vpop.xlane.xlu0 %690
        %v692 = vsel %vm628, %v672, 0.0
        %693 = vadd.xlane.f32.xlu0 %v692
        %v694 = vpop.xlane.xlu0 %693
        %v695 = vsel %vm628, %v674, 0.0
        %696 = vadd.xlane.f32.xlu0 %v695
        %v697 = vpop.xlane.xlu0 %696
        %v698 = vsel %vm628, %v676, 0.0
        %699 = vadd.xlane.f32.xlu0 %v698
        %v700 = vpop.xlane.xlu0 %699
        %v701 = vrcp.pop %v679
        %v702 = vrcp.pop %v682
        %v703 = vrcp.pop %v685
        %v704 = vrcp.pop %v688
        %v705 = vrcp.pop %v691
        %v706 = vrcp.pop %v694
        %v707 = vrcp.pop %v697
        %v708 = vrcp.pop %v700
        %v709 = vmul.f32 %v662, %v701
        %v710 = vmul.f32 %v664, %v702
        %v711 = vmul.f32 %v666, %v703
        %v712 = vmul.f32 %v668, %v704
        %v713 = vmul.f32 %v670, %v705
        %v714 = vmul.f32 %v672, %v706
        %v715 = vmul.f32 %v674, %v707
        %v716 = vmul.f32 %v676, %v708
        %vm717 = vcmask 64512
        %v719 = vsel %vm717, %v709, 0
        %721 = vmatpush.msra.mxu0 0.0
        %722 = vmatpush.msra.mxu0 0.0
        %723 = vmatpush.msra.mxu0 0.0
        %724 = vmatpush.msra.mxu0 0.0
        %725 = vmatpush.msra.mxu0 0.0
        %726 = vmatpush.msra.mxu0 0.0
        %727 = vmatpush.msra.mxu0 0.0
        %728 = vmatpush.msra.mxu0 0.0
        %729 = vmatpush.msra.mxu0 0.0
        %730 = vmatpush.msra.mxu0 0.0
        %731 = vmatpush.msra.mxu0 0.0
        %732 = vmatpush.msra.mxu0 0.0
        %733 = vmatpush.msra.mxu0 0.0
        %734 = vmatpush.msra.mxu0 0.0
        %735 = vmatpush.msra.mxu0 0.0
        %736 = vmatpush.msra.mxu0 %v411
        %737 = vmatmul.f32.gmra.mxu0 %v719
        %v738 = vpop.f32.mrf.mxu0
        %v739 = vadd.f32 0.0, %v738
        %740 = vdwg.mxu0
        %v742 = vsel %vm717, %v710, 0
        %744 = vmatpush.msra.mxu0 0.0
        %745 = vmatpush.msra.mxu0 0.0
        %746 = vmatpush.msra.mxu0 0.0
        %747 = vmatpush.msra.mxu0 0.0
        %748 = vmatpush.msra.mxu0 0.0
        %749 = vmatpush.msra.mxu0 0.0
        %750 = vmatpush.msra.mxu0 0.0
        %751 = vmatpush.msra.mxu0 0.0
        %752 = vmatpush.msra.mxu0 0.0
        %753 = vmatpush.msra.mxu0 0.0
        %754 = vmatpush.msra.mxu0 0.0
        %755 = vmatpush.msra.mxu0 0.0
        %756 = vmatpush.msra.mxu0 0.0
        %757 = vmatpush.msra.mxu0 0.0
        %758 = vmatpush.msra.mxu0 0.0
        %759 = vmatpush.msra.mxu0 %v412
        %760 = vmatmul.f32.gmra.mxu0 %v742
        %v761 = vpop.f32.mrf.mxu0
        %v762 = vadd.f32 0.0, %v761
        %763 = vdwg.mxu0
        %v765 = vsel %vm717, %v711, 0
        %767 = vmatpush.msra.mxu0 0.0
        %768 = vmatpush.msra.mxu0 0.0
        %769 = vmatpush.msra.mxu0 0.0
        %770 = vmatpush.msra.mxu0 0.0
        %771 = vmatpush.msra.mxu0 0.0
        %772 = vmatpush.msra.mxu0 0.0
        %773 = vmatpush.msra.mxu0 0.0
        %774 = vmatpush.msra.mxu0 0.0
        %775 = vmatpush.msra.mxu0 0.0
        %776 = vmatpush.msra.mxu0 0.0
        %777 = vmatpush.msra.mxu0 0.0
        %778 = vmatpush.msra.mxu0 0.0
        %779 = vmatpush.msra.mxu0 0.0
        %780 = vmatpush.msra.mxu0 0.0
        %781 = vmatpush.msra.mxu0 0.0
        %782 = vmatpush.msra.mxu0 %v413
        %783 = vmatmul.f32.gmra.mxu0 %v765
        %v784 = vpop.f32.mrf.mxu0
        %v785 = vadd.f32 0.0, %v784
        %786 = vdwg.mxu0
        %v788 = vsel %vm717, %v712, 0
        %790 = vmatpush.msra.mxu0 0.0
        %791 = vmatpush.msra.mxu0 0.0
        %792 = vmatpush.msra.mxu0 0.0
        %793 = vmatpush.msra.mxu0 0.0
        %794 = vmatpush.msra.mxu0 0.0
        %795 = vmatpush.msra.mxu0 0.0
        %796 = vmatpush.msra.mxu0 0.0
        %797 = vmatpush.msra.mxu0 0.0
        %798 = vmatpush.msra.mxu0 0.0
        %799 = vmatpush.msra.mxu0 0.0
        %800 = vmatpush.msra.mxu0 0.0
        %801 = vmatpush.msra.mxu0 0.0
        %802 = vmatpush.msra.mxu0 0.0
        %803 = vmatpush.msra.mxu0 0.0
        %804 = vmatpush.msra.mxu0 0.0
        %805 = vmatpush.msra.mxu0 %v414
        %806 = vmatmul.f32.gmra.mxu0 %v788
        %v807 = vpop.f32.mrf.mxu0
        %v808 = vadd.f32 0.0, %v807
        %809 = vdwg.mxu0
        %v811 = vsel %vm717, %v713, 0
        %813 = vmatpush.msra.mxu0 0.0
        %814 = vmatpush.msra.mxu0 0.0
        %815 = vmatpush.msra.mxu0 0.0
        %816 = vmatpush.msra.mxu0 0.0
        %817 = vmatpush.msra.mxu0 0.0
        %818 = vmatpush.msra.mxu0 0.0
        %819 = vmatpush.msra.mxu0 0.0
        %820 = vmatpush.msra.mxu0 0.0
        %821 = vmatpush.msra.mxu0 0.0
        %822 = vmatpush.msra.mxu0 0.0
        %823 = vmatpush.msra.mxu0 0.0
        %824 = vmatpush.msra.mxu0 0.0
        %825 = vmatpush.msra.mxu0 0.0
        %826 = vmatpush.msra.mxu0 0.0
        %827 = vmatpush.msra.mxu0 0.0
        %828 = vmatpush.msra.mxu0 %v415
        %829 = vmatmul.f32.gmra.mxu0 %v811
        %v830 = vpop.f32.mrf.mxu0
        %v831 = vadd.f32 0.0, %v830
        %832 = vdwg.mxu0
        %v834 = vsel %vm717, %v714, 0
        %836 = vmatpush.msra.mxu0 0.0
        %837 = vmatpush.msra.mxu0 0.0
        %838 = vmatpush.msra.mxu0 0.0
        %839 = vmatpush.msra.mxu0 0.0
        %840 = vmatpush.msra.mxu0 0.0
        %841 = vmatpush.msra.mxu0 0.0
        %842 = vmatpush.msra.mxu0 0.0
        %843 = vmatpush.msra.mxu0 0.0
        %844 = vmatpush.msra.mxu0 0.0
        %845 = vmatpush.msra.mxu0 0.0
        %846 = vmatpush.msra.mxu0 0.0
        %847 = vmatpush.msra.mxu0 0.0
        %848 = vmatpush.msra.mxu0 0.0
        %849 = vmatpush.msra.mxu0 0.0
        %850 = vmatpush.msra.mxu0 0.0
        %851 = vmatpush.msra.mxu0 %v416
        %852 = vmatmul.f32.gmra.mxu0 %v834
        %v853 = vpop.f32.mrf.mxu0
        %v854 = vadd.f32 0.0, %v853
        %855 = vdwg.mxu0
        %v857 = vsel %vm717, %v715, 0
        %859 = vmatpush.msra.mxu0 0.0
        %860 = vmatpush.msra.mxu0 0.0
        %861 = vmatpush.msra.mxu0 0.0
        %862 = vmatpush.msra.mxu0 0.0
        %863 = vmatpush.msra.mxu0 0.0
        %864 = vmatpush.msra.mxu0 0.0
        %865 = vmatpush.msra.mxu0 0.0
        %866 = vmatpush.msra.mxu0 0.0
        %867 = vmatpush.msra.mxu0 0.0
        %868 = vmatpush.msra.mxu0 0.0
        %869 = vmatpush.msra.mxu0 0.0
        %870 = vmatpush.msra.mxu0 0.0
        %871 = vmatpush.msra.mxu0 0.0
        %872 = vmatpush.msra.mxu0 0.0
        %873 = vmatpush.msra.mxu0 0.0
        %874 = vmatpush.msra.mxu0 %v417
        %875 = vmatmul.f32.gmra.mxu0 %v857
        %v876 = vpop.f32.mrf.mxu0
        %v877 = vadd.f32 0.0, %v876
        %878 = vdwg.mxu0
        %v880 = vsel %vm717, %v716, 0
        %882 = vmatpush.msra.mxu0 0.0
        %883 = vmatpush.msra.mxu0 0.0
        %884 = vmatpush.msra.mxu0 0.0
        %885 = vmatpush.msra.mxu0 0.0
        %886 = vmatpush.msra.mxu0 0.0
        %887 = vmatpush.msra.mxu0 0.0
        %888 = vmatpush.msra.mxu0 0.0
        %889 = vmatpush.msra.mxu0 0.0
        %890 = vmatpush.msra.mxu0 0.0
        %891 = vmatpush.msra.mxu0 0.0
        %892 = vmatpush.msra.mxu0 0.0
        %893 = vmatpush.msra.mxu0 0.0
        %894 = vmatpush.msra.mxu0 0.0
        %895 = vmatpush.msra.mxu0 0.0
        %896 = vmatpush.msra.mxu0 0.0
        %897 = vmatpush.msra.mxu0 %v418
        %898 = vmatmul.f32.gmra.mxu0 %v880
        %v899 = vpop.f32.mrf.mxu0
        %v900 = vadd.f32 0.0, %v899
        %901 = vdwg.mxu0
        %v910 = vrot.slane %v762, 7
        %vm911 = vcmask 1041409
        %v912 = vsel %vm911, %v910, %v739
        %v913 = vrot.slane %v785, 6
        %vm914 = vcmask 1042434
        %v915 = vsel %vm914, %v913, %v912
        %v916 = vrot.slane %v808, 5
        %vm917 = vcmask 1043459
        %v918 = vsel %vm917, %v916, %v915
        %v919 = vrot.slane %v831, 4
        %vm920 = vcmask 1044484
        %v921 = vsel %vm920, %v919, %v918
        %v922 = vrot.slane %v854, 3
        %vm923 = vcmask 1045509
        %v924 = vsel %vm923, %v922, %v921
        %v925 = vrot.slane %v877, 2
        %vm926 = vcmask 1046534
        %v927 = vsel %vm926, %v925, %v924
        %v928 = vrot.slane %v900, 1
        %vm929 = vcmask 1047559
        %v930 = vsel %vm929, %v928, %v927
        %931 = vrot.lane.b32.xlu0 %v930, 32
        %v932 = vpop.permute.xlu0 %931
        %v934 = vsel %vm427, %v408, %v932
        %v935 = vld [vmem:[%s5] sm:$0xff]
        %v936 = vld [vmem:[%s5 + $0x8] sm:$0xff]
        %v937 = vld [vmem:[%s5 + $0x10] sm:$0xff]
        %v938 = vld [vmem:[%s5 + $0x18] sm:$0xff]
        %v939 = vld [vmem:[%s5 + $0x20] sm:$0xff]
        %v940 = vld [vmem:[%s5 + $0x28] sm:$0xff]
        %v941 = vld [vmem:[%s5 + $0x30] sm:$0xff]
        %v942 = vld [vmem:[%s5 + $0x38] sm:$0xff]
        %v943 = vld [vmem:[%s7] sm:$0x1]
        %v945 = vperm.slane %v943, 0
        %vm947 = vcmask 523264
        %v949 = vsel %vm947, %v934, 0
        %951 = vmatpush.msra.mxu0 0.0
        %952 = vmatpush.msra.mxu0 0.0
        %953 = vmatpush.msra.mxu0 0.0
        %954 = vmatpush.msra.mxu0 0.0
        %955 = vmatpush.msra.mxu0 0.0
        %956 = vmatpush.msra.mxu0 0.0
        %957 = vmatpush.msra.mxu0 0.0
        %958 = vmatpush.msra.mxu0 0.0
        %959 = vmatpush.msra.mxu0 %v942
        %960 = vmatpush.msra.mxu0 %v941
        %961 = vmatpush.msra.mxu0 %v940
        %962 = vmatpush.msra.mxu0 %v939
        %963 = vmatpush.msra.mxu0 %v938
        %964 = vmatpush.msra.mxu0 %v937
        %965 = vmatpush.msra.mxu0 %v936
        %966 = vmatpush.msra.mxu0 %v935
        %967 = vmatmul.f32.gmra.mxu0 %v949
        %v968 = vpop.f32.mrf.mxu0
        %v969 = vadd.f32 %v945, %v968
        %970 = vdwg.mxu0
        %v971 = vld [vmem:[%s6] sm:$0xff]
        %v972 = vld [vmem:[%s6 + $0x8] sm:$0xff]
        %v973 = vld [vmem:[%s6 + $0x10] sm:$0xff]
        %v974 = vld [vmem:[%s6 + $0x18] sm:$0xff]
        %v975 = vld [vmem:[%s8] sm:$0x1]
        %v977 = vperm.slane %v975, 0
        %979 = vmatpush.msra.mxu0 0.0
        %980 = vmatpush.msra.mxu0 0.0
        %981 = vmatpush.msra.mxu0 0.0
        %982 = vmatpush.msra.mxu0 0.0
        %983 = vmatpush.msra.mxu0 0.0
        %984 = vmatpush.msra.mxu0 0.0
        %985 = vmatpush.msra.mxu0 0.0
        %986 = vmatpush.msra.mxu0 0.0
        %987 = vmatpush.msra.mxu0 0.0
        %988 = vmatpush.msra.mxu0 0.0
        %989 = vmatpush.msra.mxu0 0.0
        %990 = vmatpush.msra.mxu0 0.0
        %991 = vmatpush.msra.mxu0 %v974
        %992 = vmatpush.msra.mxu0 %v973
        %993 = vmatpush.msra.mxu0 %v972
        %994 = vmatpush.msra.mxu0 %v971
        %995 = vmatmul.f32.gmra.mxu0 %v428
        %v996 = vpop.f32.mrf.mxu0
        %v997 = vadd.f32 %v977, %v996
        %998 = vdwg.mxu0
        %v999 = vadd.f32 %v969, %v997
        %v1000 = vxor.u32 %v999, 2147483648
        %v1001 = vmul.f32 %v1000, 1.442695
        %v1002 = vpow.pop %v1001
        %v1003 = vadd.f32 %v1002, 1.0
        %v1004 = vrcp.pop %v1003
        %v1005 = vmul.f32 %v1003, %v1004
        %v1006 = vsub.f32 1.0, %v1005
        %v1007 = vmul.f32 %v1004, %v1006
        %v1008 = vadd.f32 %v1004, %v1007
        %vm1009 = vweird.f32 %v1003
        %vm1010 = vweird.f32 %v1004
        %vm1011 = vmor %vm1009, %vm1010
        %v1012 = vsel %vm1011, %v1004, %v1008
        %v1013 = vand.u32 2147483647, %v1003
        %vm1014 = vcmp.eq.f32.partialorder %v1013, 8.507059e+37
        %v1015 = vand.u32 %v1003, 2147483648
        %v1016 = vor.u32 1.1754944e-38, %v1015
        %v1017 = vsel %vm1014, %v1016, %v1012
        %v1018 = vmul.f32 1.0, %v1017
        %1020 = vrot.lane.b32.xlu0 %v997, 64
        %v1021 = vpop.permute.xlu0 %1020
        %v1023 = vmul.f32 %v1018, %v1021
        %1025 = vrot.lane.b32.xlu0 %v1023, 64
        %v1026 = vpop.permute.xlu0 %1025
        %v1028 = vadd.f32 %v969, %v1026
        %v1029 = vtanh.pop %v1028
        %v1030 = vsub.f32 1.0, %v1018
        %1032 = vrot.lane.b32.xlu0 %v1029, 96
        %v1033 = vpop.permute.xlu0 %1032
        %v1035 = vmul.f32 %v1030, %v1033
        %1036 = vrot.lane.b32.xlu0 %v410, 32
        %v1037 = vpop.permute.xlu0 %1036
        %v1039 = vmul.f32 %v1018, %v1037
        %v1040 = vadd.f32 %v1035, %v1039
        %1042 = vrot.lane.b32.xlu0 %v1040, 96
        %v1043 = vpop.permute.xlu0 %1042
        %v1045 = vsel %vm427, %v1043, %v932
        %v1046 = vld [vmem:[%s9] sm:$0xff]
        %v1047 = vld [vmem:[%s9 + $0x8] sm:$0xff]
        %v1048 = vld [vmem:[%s9 + $0x10] sm:$0xff]
        %v1049 = vld [vmem:[%s9 + $0x18] sm:$0xff]
        %v1050 = vld [vmem:[%s9 + $0x20] sm:$0xff]
        %v1051 = vld [vmem:[%s9 + $0x28] sm:$0xff]
        %v1052 = vld [vmem:[%s9 + $0x30] sm:$0xff]
        %v1053 = vld [vmem:[%s9 + $0x38] sm:$0xff]
        %v1054 = vld [vmem:[%s10] sm:$0x1]
        %v1056 = vperm.slane %v1054, 0
        %v1059 = vsel %vm947, %v1045, 0
        %1061 = vmatpush.msra.mxu0 0.0
        %1062 = vmatpush.msra.mxu0 0.0
        %1063 = vmatpush.msra.mxu0 0.0
        %1064 = vmatpush.msra.mxu0 0.0
        %1065 = vmatpush.msra.mxu0 0.0
        %1066 = vmatpush.msra.mxu0 0.0
        %1067 = vmatpush.msra.mxu0 0.0
        %1068 = vmatpush.msra.mxu0 0.0
        %1069 = vmatpush.msra.mxu0 %v1053
        %1070 = vmatpush.msra.mxu0 %v1052
        %1071 = vmatpush.msra.mxu0 %v1051
        %1072 = vmatpush.msra.mxu0 %v1050
        %1073 = vmatpush.msra.mxu0 %v1049
        %1074 = vmatpush.msra.mxu0 %v1048
        %1075 = vmatpush.msra.mxu0 %v1047
        %1076 = vmatpush.msra.mxu0 %v1046
        %1077 = vmatmul.f32.gmra.mxu0 %v1059
        %v1078 = vpop.f32.mrf.mxu0
        %v1079 = vadd.f32 %v1056, %v1078
        %1080 = vdwg.mxu0
        %1081 = vmax.xlane.f32.xlu0 %v1079
        %v1082 = vpop.xlane.xlu0 %1081
        %vm1083 = vcmp.eq.f32.partialorder %v1079, %v1082
        %v1084 = vsel %vm1083, %v367, 128
        %v1085 = vand.u32 %v1084, 65535
        %v1086 = vshra.s32 %v1084, 16
        %v1087 = vcvt.s32.f32 %v1085
        %v1088 = vcvt.s32.f32 %v1086
        %1089 = vmin.xlane.f32.xlu0 %v1088
        %v1090 = vpop.xlane.xlu0 %1089
        %vm1091 = vcmp.eq.f32.partialorder %v1088, %v1090
        %v1092 = vsel %vm1091, %v1087, inf
        %1093 = vmin.xlane.f32.xlu0 %v1092
        %v1094 = vpop.xlane.xlu0 %1093
        %v1095 = vcvt.f32.s32 %v1094
        %v1096 = vcvt.f32.s32 %v1090
        %v1097 = vshll.u32 %v1096, 16
        %v1098 = vadd.s32 %v1097, %v1095
        %1099 = vst.msk [vmem:[#allocation2] sm:$0xff] %vm427, %v1043
        %vm1100 = vcmask 7168
        %1101 = vst.msk [vmem:[#allocation3] sm:$0xff] %vm1100, %v1098
        %1102 = vst [vmem:[%s346] sm:$0xff] %v1079
        %s1103 = sand.u32 %s251, 1
        %s1104 = scalar_lea.sflag [#allocation7], %s1103
        %s1105 = sand.u32 %s251, 1
        %s1106 = smul.addr %s1105, 8
        %s1107 = scalar_lea.vmem [#allocation6], %s1106
        // Predicated region
        $region65: #{_seq2seq_core.3} parent=59 // pred_check
          %p1108 = pneg %p261
        $region66: #{_seq2seq_core.3} parent=59 // pred_check_branch
          %1110 = sbr.rel (%p1108) target = $region68
        $region67: #{_seq2seq_core.3} parent=59 // pred_region
          %1112 = vsyncadd %s1104, 0
          %s1113 = smul.addr %s33, 8
          %s1114 = scalar_lea.hbm %s11, %s1113
          %s1116 = sshll.u32 %s1107, 4
          %s1117 = int_to_ptr.vmem [resolvable:$true] %s1116
          %s1118 = sshll.u32 %s1114, 4
          %s1119 = int_to_ptr.hbm [resolvable:$true] %s1118
          %1121 = dma.vmem_to_hbm [thread:$0]  %s1117, 128, %s1119, %s1104
        $region68: #{_seq2seq_core.3} parent=59 // pred_fallthru
          _
      $region60: #{_seq2seq_core.3} parent=5 // pred_fallthru
        _
      %p1122 = scmp.le.s32.totalorder 2, %s28
      // Predicated region
      $region69: #{_seq2seq_core.3} parent=5 // pred_check
        %p1123 = pneg %p1122
      $region70: #{_seq2seq_core.3} parent=5 // pred_check_branch
        %1125 = sbr.rel (%p1123) target = $region72
      $region71: #{_seq2seq_core.3} parent=5 // pred_region
        %s1126 = ssub.s32 %s28, 2
        // Predicated region
        $region73: #{_seq2seq_core.3} parent=71 // pred_check
          %p1127 = pneg %p267
        $region74: #{_seq2seq_core.3} parent=71 // pred_check_branch
          %1129 = sbr.rel (%p1127) target = $region76
        $region75: #{_seq2seq_core.3} parent=71 // pred_region
          %s1130 = sand.u32 %s252, 1
          %s1131 = scalar_lea.sflag [#allocation7], %s1130
          %s1132 = sand.u32 %s252, 1
          %s1133 = smul.addr %s1132, 8
          %s1134 = scalar_lea.vmem [#allocation6], %s1133
          %1136 = dma.done %s1131, 128
        $region76: #{_seq2seq_core.3} parent=71 // pred_fallthru
          _
      $region72: #{_seq2seq_core.3} parent=5 // pred_fallthru
        _
    $region6: #{_seq2seq_core.3} parent=1 // loop_footer
      %s32 = sadd.s32 1, %s28
    $region7: #{_seq2seq_core.3} parent=1 // loop_footer_branch
      %27 = sbr.rel target = $region3
    $region8: #{_seq2seq_core.3} parent=1 // loop_exit
      _
    %1137 = vsyncpa [#allocation7], 1
    %s1138 = scalar_lea.sflag [#allocation7], 1
    %1139 = vsyncpa %s1138, 1

</llo_original>
